<compile_context>
chip_gen: v7x
topology: tpu7x:2x2x1
jax: 0.10.0
libtpu: 0.0.40
codegen_flags: <defaults>
</compile_context>

<pallas_src>
import functools

import jax
import jax.numpy as jnp
from jax.experimental import pallas as pl
from jax.experimental.pallas import tpu as pltpu

_LANE = 128


def _round_up(n, m):
    return ((n + m - 1) // m) * m


def _lane_pad(n):
    return _round_up(max(int(n), 1), _LANE)


def critic_kernel(x_ref, y_ref, w1x_ref, w1y_ref, b1_ref, w2_ref, b2_ref,
                  o_ref, *, tb, hid):
    # ---- Layer 1: concat(x, y) @ W1 + b1, concat folded into two full-tile
    # MXU matmuls against the pre-split weights (no sublane-offset slicing).
    h = jnp.dot(x_ref[...], w1x_ref[...], preferred_element_type=jnp.float32)
    h = h + jnp.dot(y_ref[...], w1y_ref[...], preferred_element_type=jnp.float32)
    h = jnp.maximum(h + b1_ref[...], 0.0)                     # (tb, hid) f32

    # ---- Layer 2 (out_features == 1): VPU multiply + lane reduction.
    # Each group of 128 batch rows lands on lanes -> lane-dense output slab.
    # TODO(synk): if a bundle dump ever shows the XLU relayout binding, switch
    # to the transposed (hid-on-sublanes) formulation.
    h3 = h.reshape(tb // _LANE, _LANE, hid)
    z = jnp.sum(h3 * w2_ref[...], axis=-1) + b2_ref[0]        # (tb//128, 128) f32
    o_ref[...] = jax.nn.sigmoid(z).astype(o_ref.dtype)


def _vmem_capacity_bytes():
    try:
        cap = int(pltpu.get_tpu_info().vmem_capacity_bytes)
        if cap > 0:
            return cap
    except Exception:
        pass
    return 64 * 1024 * 1024  # conservative default (v7x per-TC VMEM)


def _choose_tile(b128, x_dim, y_dim, x_bytes, y_bytes, out_bytes,
                 weight_bytes, vmem_limit, max_rows):
    """Pick the batch tile (rows) from a lane-padded VMEM budget."""
    # Per-row VMEM: double-buffered x/y/out tiles (lane-padded widths) plus
    # ~4 hidden-sized f32 temporaries for the matmul partials / ReLU / reduce.
    per_row = (2 * (_lane_pad(x_dim) * x_bytes + _lane_pad(y_dim) * y_bytes)
               + 4 * _LANE * 4 + 2 * out_bytes)
    budget = vmem_limit - 2 * weight_bytes - (2 << 20)
    tb_vmem = max(1024, (max(budget, per_row * 1024) // per_row) // 1024 * 1024)

    # Keep >= 2 (ideally 4) grid steps for mid/large batches so the "parallel"
    # axis can feed both v7x TensorCores, without shrinking tiles below the
    # per-step-overhead amortization floor.
    min_rows = 4096
    if b128 >= 4 * min_rows:
        target_tiles = 4
    elif b128 >= 2 * min_rows:
        target_tiles = 2
    else:
        target_tiles = 1
    tb = min(tb_vmem, _round_up(pl.cdiv(b128, target_tiles), 1024),
             _round_up(max_rows, 1024))
    if tb >= b128:
        return b128                      # single tile, block == full array dims
    # Multi-tile: tb//128 must be a multiple of 8 -> tb multiple of 1024.
    return max(1024, (tb // 1024) * 1024)


def critic_func(x, y, params, *, max_block_rows=32768):
    """x: [B, x_dim], y: [B, y_dim] -> [B, 1]."""
    w1, b1, w2, b2 = params["w1"], params["b1"], params["w2"], params["b2"]
    B, x_dim = x.shape
    y_dim = y.shape[-1]
    cat_dim = x_dim + y_dim
    hid = w1.shape[-1]
    assert w1.shape == (cat_dim, hid)
    assert y.shape[0] == B
    out_dtype = x.dtype

    # Host-side one-time split of the tiny resident weight; each half matches
    # its input's dtype so both MXU operands agree (no per-step upcast) and the
    # large activations are streamed in whatever dtype they arrive in.
    w1x = w1[:x_dim].astype(x.dtype)
    w1y = w1[x_dim:].astype(y.dtype)
    b1_2d = b1.reshape(1, hid).astype(jnp.float32)
    w2_row = w2.reshape(1, hid).astype(jnp.float32)   # layer 2 stays on VPU, f32
    b2_s = b2.reshape(1).astype(jnp.float32)          # scalar, lives in SMEM

    vmem_cap = _vmem_capacity_bytes()
    vmem_limit = max(16 << 20, min(int(vmem_cap * 0.75), vmem_cap - (8 << 20)))

    b128 = _round_up(B, _LANE)
    weight_bytes = (w1x.size * w1x.dtype.itemsize + w1y.size * w1y.dtype.itemsize
                    + b1_2d.size * 4 + w2_row.size * 4 + 4)
    tb = _choose_tile(b128, x_dim, y_dim,
                      x.dtype.itemsize, y.dtype.itemsize,
                      jnp.dtype(out_dtype).itemsize,
                      weight_bytes, vmem_limit, max_block_rows)
    num_tiles = pl.cdiv(b128, tb)

    kernel = functools.partial(critic_kernel, tb=tb, hid=hid)

    cost = pl.CostEstimate(
        flops=2 * B * cat_dim * hid + 2 * B * hid,
        transcendentals=2 * B,  # sigmoid = exp + reciprocal per row
        bytes_accessed=(x.size * x.dtype.itemsize + y.size * y.dtype.itemsize
                        + weight_bytes + B * jnp.dtype(out_dtype).itemsize),
    )

    def build(weight_buffer_count):
        wkw = {}
        if weight_buffer_count is not None:
            wkw = dict(pipeline_mode=pl.Buffered(weight_buffer_count))
        in_specs = [
            pl.BlockSpec((tb, x_dim), lambda i: (i, 0)),           # x rows tile
            pl.BlockSpec((tb, y_dim), lambda i: (i, 0)),           # y rows tile
            pl.BlockSpec((x_dim, hid), lambda i: (0, 0), **wkw),   # W1[:x_dim]
            pl.BlockSpec((y_dim, hid), lambda i: (0, 0), **wkw),   # W1[x_dim:]
            pl.BlockSpec((1, hid), lambda i: (0, 0), **wkw),       # b1
            pl.BlockSpec((1, hid), lambda i: (0, 0), **wkw),       # W2 as a row
            pl.BlockSpec(memory_space=pltpu.MemorySpace.SMEM),     # b2 scalar
        ]
        return pl.pallas_call(
            kernel,
            out_shape=jax.ShapeDtypeStruct((b128 // _LANE, _LANE), out_dtype),
            grid=(num_tiles,),
            in_specs=in_specs,
            out_specs=pl.BlockSpec((tb // _LANE, _LANE), lambda i: (i, 0)),
            compiler_params=pltpu.CompilerParams(
                dimension_semantics=("parallel",),   # megacore-split batch
                vmem_limit_bytes=vmem_limit,         # generation-aware limit
            ),
            cost_estimate=cost,
        )

    args = (x, y, w1x, w1y, b1_2d, w2_row, b2_s)
    try:
        # Single-buffer the resident weights (constant index_map) to leave
        # VMEM for bigger batch tiles; matters at production cat_dim on v7x.
        out = build(1)(*args)
    except Exception:
        out = build(None)(*args)   # fall back to default double-buffering

    # (b128//128, 128) -> (b128, 1) is a free row-major reshape; rows past B
    # (over-read / partial-block garbage) are dropped here.
    return out.reshape(b128, 1)[:B]


def init_params(key, x_dim, y_dim, dtype=jnp.float32):
    cat_dim = x_dim + y_dim
    hid = cat_dim // 4
    k1, k2, k3, k4 = jax.random.split(key, 4)
    lim1 = 1.0 / jnp.sqrt(cat_dim)
    lim2 = 1.0 / jnp.sqrt(hid)
    return {
        "w1": jax.random.uniform(k1, (cat_dim, hid), dtype, -lim1, lim1),
        "b1": jax.random.uniform(k2, (hid,), dtype, -lim1, lim1),
        "w2": jax.random.uniform(k3, (hid, 1), dtype, -lim2, lim2),
        "b2": jax.random.uniform(k4, (1,), dtype, -lim2, lim2),
    }


def reference(x, y, params):
    cat = jnp.concatenate([x, y], axis=-1)
    h = jnp.maximum(cat @ params["w1"] + params["b1"], 0.0)
    return jax.nn.sigmoid(h @ params["w2"] + params["b2"])


if __name__ == "__main__":
    key = jax.random.PRNGKey(0)
    kx, ky, kp, kx2, ky2 = jax.random.split(key, 5)

    x_dim, y_dim = 24, 8                 # cat_dim = 32, hidden = 8
    params = init_params(kp, x_dim, y_dim)

    # Small batch (single tile, partial block: B < 128).
    B = 8
    x = jax.random.normal(kx, (B, x_dim), jnp.float32)
    y = jax.random.normal(ky, (B, y_dim), jnp.float32)
    out = jax.block_until_ready(critic_func(x, y, params))
    ref = reference(x, y, params)
    assert out.shape == (B, 1), out.shape
    assert jnp.allclose(out, ref, atol=1e-5, rtol=1e-5), (out, ref)

    # Larger odd batch (multi-tile grid with a partial last block, no padding).
    B2 = 9000
    x2 = jax.random.normal(kx2, (B2, x_dim), jnp.float32)
    y2 = jax.random.normal(ky2, (B2, y_dim), jnp.float32)
    out2 = jax.block_until_ready(critic_func(x2, y2, params))
    ref2 = reference(x2, y2, params)
    assert out2.shape == (B2, 1), out2.shape
    assert jnp.allclose(out2, ref2, atol=1e-4, rtol=1e-4)

    # Native bf16 activations (no wrapper-side cast of x/y; W1 halves follow).
    out_bf16 = jax.block_until_ready(
        critic_func(x.astype(jnp.bfloat16), y.astype(jnp.bfloat16), params))
    assert out_bf16.shape == (B, 1), out_bf16.shape
    assert jnp.allclose(out_bf16.astype(jnp.float32), ref, atol=3e-2, rtol=0.0)

    print("KERNEL_OK")
</pallas_src>

<mosaic_0001>
module attributes {stable_mosaic.version = 11 : i64} {
  func.func @critic_kernel(%arg0: i32, %arg1: memref<128x24xf32, #tpu.memory_space<vmem>>, %arg2: memref<128x8xf32, #tpu.memory_space<vmem>>, %arg3: memref<24x8xf32, #tpu.memory_space<vmem>>, %arg4: memref<8x8xf32, #tpu.memory_space<vmem>>, %arg5: memref<1x8xf32, #tpu.memory_space<vmem>>, %arg6: memref<1x8xf32, #tpu.memory_space<vmem>>, %arg7: memref<1xf32, #tpu.memory_space<smem>>, %arg8: memref<1x128xf32, #tpu.memory_space<vmem>>) attributes {dimension_semantics = [#tpu.dimension_semantics<parallel>], iteration_bounds = array<i64: 1>, scalar_prefetch = 0 : i64, scratch_operands = 0 : i64, tpu.core_type = #tpu.core_type<tc>, window_params = [{transform_indices = @transform_0, window_bounds = array<i64: 128, 24>}, {transform_indices = @transform_1, window_bounds = array<i64: 128, 8>}, {pipeline_mode = #tpu.pipeline_mode<synchronous>, transform_indices = @transform_2, window_bounds = array<i64: 24, 8>}, {pipeline_mode = #tpu.pipeline_mode<synchronous>, transform_indices = @transform_3, window_bounds = array<i64: 8, 8>}, {pipeline_mode = #tpu.pipeline_mode<synchronous>, transform_indices = @transform_4, window_bounds = array<i64: 1, 8>}, {pipeline_mode = #tpu.pipeline_mode<synchronous>, transform_indices = @transform_5, window_bounds = array<i64: 1, 8>}, {transform_indices = @transform_6, window_bounds = array<i64: 1>}, {transform_indices = @transform_7, window_bounds = array<i64: 1, 128>}]} {
    %c0 = arith.constant 0 : index
    %c0_0 = arith.constant 0 : index
    %0 = vector.load %arg1[%c0, %c0_0] : memref<128x24xf32, #tpu.memory_space<vmem>>, vector<128x24xf32>
    %c0_1 = arith.constant 0 : index
    %c0_2 = arith.constant 0 : index
    %1 = vector.load %arg3[%c0_1, %c0_2] : memref<24x8xf32, #tpu.memory_space<vmem>>, vector<24x8xf32>
    %cst = arith.constant dense<0.000000e+00> : vector<128x8xf32>
    %2 = tpu.matmul %0, %1, %cst {dimension_numbers = #tpu.dot_dimension_numbers<[1], [0], [0], [1], [0, 0, 1, 1], [], []>} : vector<128x24xf32>, vector<24x8xf32>, vector<128x8xf32> -> vector<128x8xf32>
    %c0_3 = arith.constant 0 : index
    %c0_4 = arith.constant 0 : index
    %3 = vector.load %arg2[%c0_3, %c0_4] : memref<128x8xf32, #tpu.memory_space<vmem>>, vector<128x8xf32>
    %c0_5 = arith.constant 0 : index
    %c0_6 = arith.constant 0 : index
    %4 = vector.load %arg4[%c0_5, %c0_6] : memref<8x8xf32, #tpu.memory_space<vmem>>, vector<8x8xf32>
    %cst_7 = arith.constant dense<0.000000e+00> : vector<128x8xf32>
    %5 = tpu.matmul %3, %4, %cst_7 {dimension_numbers = #tpu.dot_dimension_numbers<[1], [0], [0], [1], [0, 0, 1, 1], [], []>} : vector<128x8xf32>, vector<8x8xf32>, vector<128x8xf32> -> vector<128x8xf32>
    %6 = arith.addf %2, %5 : vector<128x8xf32>
    %c0_8 = arith.constant 0 : index
    %c0_9 = arith.constant 0 : index
    %7 = vector.load %arg5[%c0_8, %c0_9] : memref<1x8xf32, #tpu.memory_space<vmem>>, vector<1x8xf32>
    %8 = vector.broadcast %7 : vector<1x8xf32> to vector<128x8xf32>
    %9 = arith.addf %6, %8 : vector<128x8xf32>
    %cst_10 = arith.constant 0.000000e+00 : f32
    %10 = vector.broadcast %cst_10 : f32 to vector<128x8xf32>
    %11 = arith.maximumf %9, %10 : vector<128x8xf32>
    %12 = vector.shape_cast %11 : vector<128x8xf32> to vector<1x128x8xf32>
    %c0_11 = arith.constant 0 : index
    %c0_12 = arith.constant 0 : index
    %13 = vector.load %arg6[%c0_11, %c0_12] : memref<1x8xf32, #tpu.memory_space<vmem>>, vector<1x8xf32>
    %14 = vector.shape_cast %13 : vector<1x8xf32> to vector<1x1x8xf32>
    %15 = vector.broadcast %14 : vector<1x1x8xf32> to vector<1x128x8xf32>
    %16 = arith.mulf %12, %15 : vector<1x128x8xf32>
    %cst_13 = arith.constant dense<0.000000e+00> : vector<1x128xf32>
    %17 = vector.multi_reduction <add>, %16, %cst_13 [2] : vector<1x128x8xf32> to vector<1x128xf32>
    %c0_14 = arith.constant 0 : index
    %18 = memref.load %arg7[%c0_14] : memref<1xf32, #tpu.memory_space<smem>>
    %19 = vector.broadcast %18 : f32 to vector<1x128xf32>
    %20 = arith.addf %17, %19 : vector<1x128xf32>
    %21 = arith.negf %20 : vector<1x128xf32>
    %22 = math.exp %21 : vector<1x128xf32>
    %cst_15 = arith.constant 1.000000e+00 : f32
    %23 = vector.broadcast %cst_15 : f32 to vector<1x128xf32>
    %24 = arith.addf %23, %22 : vector<1x128xf32>
    %25 = arith.divf %23, %24 : vector<1x128xf32>
    %c0_16 = arith.constant 0 : index
    %c0_17 = arith.constant 0 : index
    %26 = vector.load %arg8[%c0_16, %c0_17] : memref<1x128xf32, #tpu.memory_space<vmem>>, vector<1x128xf32>
    tpu.vector_store %arg8[%c0_16, %c0_17], %25 {strides = array<i32>} : memref<1x128xf32, #tpu.memory_space<vmem>>, vector<1x128xf32>,
    return
  }
  func.func @transform_0(%arg0: i32) -> (i32, i32) {
    %c0_i32 = arith.constant 0 : i32
    %c0_i32_0 = arith.constant 0 : i32
    return %arg0, %c0_i32 : i32, i32
  }
  func.func @transform_1(%arg0: i32) -> (i32, i32) {
    %c0_i32 = arith.constant 0 : i32
    %c0_i32_0 = arith.constant 0 : i32
    return %arg0, %c0_i32 : i32, i32
  }
  func.func @transform_2(%arg0: i32) -> (i32, i32) {
    %c0_i32 = arith.constant 0 : i32
    %c0_i32_0 = arith.constant 0 : i32
    %c0_i32_1 = arith.constant 0 : i32
    return %c0_i32, %c0_i32_0 : i32, i32
  }
  func.func @transform_3(%arg0: i32) -> (i32, i32) {
    %c0_i32 = arith.constant 0 : i32
    %c0_i32_0 = arith.constant 0 : i32
    %c0_i32_1 = arith.constant 0 : i32
    return %c0_i32, %c0_i32_0 : i32, i32
  }
  func.func @transform_4(%arg0: i32) -> (i32, i32) {
    %c0_i32 = arith.constant 0 : i32
    %c0_i32_0 = arith.constant 0 : i32
    %c0_i32_1 = arith.constant 0 : i32
    return %c0_i32, %c0_i32_0 : i32, i32
  }
  func.func @transform_5(%arg0: i32) -> (i32, i32) {
    %c0_i32 = arith.constant 0 : i32
    %c0_i32_0 = arith.constant 0 : i32
    %c0_i32_1 = arith.constant 0 : i32
    return %c0_i32, %c0_i32_0 : i32, i32
  }
  func.func @transform_6(%arg0: i32) -> i32 {
    %c0_i32 = arith.constant 0 : i32
    %c0_i32_0 = arith.constant 0 : i32
    return %c0_i32 : i32
  }
  func.func @transform_7(%arg0: i32) -> (i32, i32) {
    %c0_i32 = arith.constant 0 : i32
    %c0_i32_0 = arith.constant 0 : i32
    return %arg0, %c0_i32 : i32, i32
  }
}

module attributes {stable_mosaic.version = 11 : i64} {
  func.func @critic_kernel(%arg0: i32, %arg1: memref<128x24xf32, #tpu.memory_space<vmem>>, %arg2: memref<128x8xf32, #tpu.memory_space<vmem>>, %arg3: memref<24x8xf32, #tpu.memory_space<vmem>>, %arg4: memref<8x8xf32, #tpu.memory_space<vmem>>, %arg5: memref<1x8xf32, #tpu.memory_space<vmem>>, %arg6: memref<1x8xf32, #tpu.memory_space<vmem>>, %arg7: memref<1xf32, #tpu.memory_space<smem>>, %arg8: memref<1x128xf32, #tpu.memory_space<vmem>>) attributes {dimension_semantics = [#tpu.dimension_semantics<parallel>], iteration_bounds = array<i64: 1>, scalar_prefetch = 0 : i64, scratch_operands = 0 : i64, tpu.core_type = #tpu.core_type<tc>, window_params = [{transform_indices = @transform_0, window_bounds = array<i64: 128, 24>}, {transform_indices = @transform_1, window_bounds = array<i64: 128, 8>}, {pipeline_mode = #tpu.pipeline_mode<synchronous>, transform_indices = @transform_2, window_bounds = array<i64: 24, 8>}, {pipeline_mode = #tpu.pipeline_mode<synchronous>, transform_indices = @transform_3, window_bounds = array<i64: 8, 8>}, {pipeline_mode = #tpu.pipeline_mode<synchronous>, transform_indices = @transform_4, window_bounds = array<i64: 1, 8>}, {pipeline_mode = #tpu.pipeline_mode<synchronous>, transform_indices = @transform_5, window_bounds = array<i64: 1, 8>}, {transform_indices = @transform_6, window_bounds = array<i64: 1>}, {transform_indices = @transform_7, window_bounds = array<i64: 1, 128>}]} {
    %c0 = arith.constant 0 : index
    %c0_0 = arith.constant 0 : index
    %0 = vector.load %arg1[%c0, %c0_0] : memref<128x24xf32, #tpu.memory_space<vmem>>, vector<128x24xf32>
    %c0_1 = arith.constant 0 : index
    %c0_2 = arith.constant 0 : index
    %1 = vector.load %arg3[%c0_1, %c0_2] : memref<24x8xf32, #tpu.memory_space<vmem>>, vector<24x8xf32>
    %cst = arith.constant dense<0.000000e+00> : vector<128x8xf32>
    %2 = tpu.matmul %0, %1, %cst {dimension_numbers = #tpu.dot_dimension_numbers<[1], [0], [0], [1], [0, 0, 1, 1], [], []>} : vector<128x24xf32>, vector<24x8xf32>, vector<128x8xf32> -> vector<128x8xf32>
    %c0_3 = arith.constant 0 : index
    %c0_4 = arith.constant 0 : index
    %3 = vector.load %arg2[%c0_3, %c0_4] : memref<128x8xf32, #tpu.memory_space<vmem>>, vector<128x8xf32>
    %c0_5 = arith.constant 0 : index
    %c0_6 = arith.constant 0 : index
    %4 = vector.load %arg4[%c0_5, %c0_6] : memref<8x8xf32, #tpu.memory_space<vmem>>, vector<8x8xf32>
    %cst_7 = arith.constant dense<0.000000e+00> : vector<128x8xf32>
    %5 = tpu.matmul %3, %4, %cst_7 {dimension_numbers = #tpu.dot_dimension_numbers<[1], [0], [0], [1], [0, 0, 1, 1], [], []>} : vector<128x8xf32>, vector<8x8xf32>, vector<128x8xf32> -> vector<128x8xf32>
    %6 = arith.addf %2, %5 : vector<128x8xf32>
    %c0_8 = arith.constant 0 : index
    %c0_9 = arith.constant 0 : index
    %7 = vector.load %arg5[%c0_8, %c0_9] : memref<1x8xf32, #tpu.memory_space<vmem>>, vector<1x8xf32>
    %8 = vector.broadcast %7 : vector<1x8xf32> to vector<128x8xf32>
    %9 = arith.addf %6, %8 : vector<128x8xf32>
    %cst_10 = arith.constant 0.000000e+00 : f32
    %10 = vector.broadcast %cst_10 : f32 to vector<128x8xf32>
    %11 = arith.maximumf %9, %10 : vector<128x8xf32>
    %12 = vector.shape_cast %11 : vector<128x8xf32> to vector<1x128x8xf32>
    %c0_11 = arith.constant 0 : index
    %c0_12 = arith.constant 0 : index
    %13 = vector.load %arg6[%c0_11, %c0_12] : memref<1x8xf32, #tpu.memory_space<vmem>>, vector<1x8xf32>
    %14 = vector.shape_cast %13 : vector<1x8xf32> to vector<1x1x8xf32>
    %15 = vector.broadcast %14 : vector<1x1x8xf32> to vector<1x128x8xf32>
    %16 = arith.mulf %12, %15 : vector<1x128x8xf32>
    %cst_13 = arith.constant dense<0.000000e+00> : vector<1x128xf32>
    %17 = vector.multi_reduction <add>, %16, %cst_13 [2] : vector<1x128x8xf32> to vector<1x128xf32>
    %c0_14 = arith.constant 0 : index
    %18 = memref.load %arg7[%c0_14] : memref<1xf32, #tpu.memory_space<smem>>
    %19 = vector.broadcast %18 : f32 to vector<1x128xf32>
    %20 = arith.addf %17, %19 : vector<1x128xf32>
    %21 = arith.negf %20 : vector<1x128xf32>
    %22 = math.exp %21 : vector<1x128xf32>
    %cst_15 = arith.constant 1.000000e+00 : f32
    %23 = vector.broadcast %cst_15 : f32 to vector<1x128xf32>
    %24 = arith.addf %23, %22 : vector<1x128xf32>
    %25 = arith.divf %23, %24 : vector<1x128xf32>
    %c0_16 = arith.constant 0 : index
    %c0_17 = arith.constant 0 : index
    %26 = vector.load %arg8[%c0_16, %c0_17] : memref<1x128xf32, #tpu.memory_space<vmem>>, vector<1x128xf32>
    tpu.vector_store %arg8[%c0_16, %c0_17], %25 {strides = array<i32>} : memref<1x128xf32, #tpu.memory_space<vmem>>, vector<1x128xf32>,
    return
  }
  func.func @transform_0(%arg0: i32) -> (i32, i32) {
    %c0_i32 = arith.constant 0 : i32
    %c0_i32_0 = arith.constant 0 : i32
    return %arg0, %c0_i32 : i32, i32
  }
  func.func @transform_1(%arg0: i32) -> (i32, i32) {
    %c0_i32 = arith.constant 0 : i32
    %c0_i32_0 = arith.constant 0 : i32
    return %arg0, %c0_i32 : i32, i32
  }
  func.func @transform_2(%arg0: i32) -> (i32, i32) {
    %c0_i32 = arith.constant 0 : i32
    %c0_i32_0 = arith.constant 0 : i32
    %c0_i32_1 = arith.constant 0 : i32
    return %c0_i32, %c0_i32_0 : i32, i32
  }
  func.func @transform_3(%arg0: i32) -> (i32, i32) {
    %c0_i32 = arith.constant 0 : i32
    %c0_i32_0 = arith.constant 0 : i32
    %c0_i32_1 = arith.constant 0 : i32
    return %c0_i32, %c0_i32_0 : i32, i32
  }
  func.func @transform_4(%arg0: i32) -> (i32, i32) {
    %c0_i32 = arith.constant 0 : i32
    %c0_i32_0 = arith.constant 0 : i32
    %c0_i32_1 = arith.constant 0 : i32
    return %c0_i32, %c0_i32_0 : i32, i32
  }
  func.func @transform_5(%arg0: i32) -> (i32, i32) {
    %c0_i32 = arith.constant 0 : i32
    %c0_i32_0 = arith.constant 0 : i32
    %c0_i32_1 = arith.constant 0 : i32
    return %c0_i32, %c0_i32_0 : i32, i32
  }
  func.func @transform_6(%arg0: i32) -> i32 {
    %c0_i32 = arith.constant 0 : i32
    %c0_i32_0 = arith.constant 0 : i32
    return %c0_i32 : i32
  }
  func.func @transform_7(%arg0: i32) -> (i32, i32) {
    %c0_i32 = arith.constant 0 : i32
    %c0_i32_0 = arith.constant 0 : i32
    return %arg0, %c0_i32 : i32, i32
  }
}

</mosaic_0001>

<llo_original>
// kernel: tpu_custom_call.1
$region0: #{tpu_custom_call.1}
  #allocation0 [shape = 'u32[]', space=smem, size = 0x4, offset = 0x4, fixed_abs, tag = 'smem constant byte address 0x4 - core index']
  #allocation1 [shape = 'u32[144,128]{1,0:T(1,128)}', space=vmem, size = 0x12000, scoped, tag = 'internal scratch']
  #allocation2 [shape = 'f32[1]{0:T(128)S(6)}', space=smem, size = 0x200, scoped, tag = 'scoped memory for tpu_custom_call.1']
  %s0 = inlined_call_operand.vmem [shape: f32[8,24], index: 0, kind: input, shape index: {}]
  %s1 = inlined_call_operand.vmem [shape: f32[8,8], index: 1, kind: input, shape index: {}]
  %s2 = inlined_call_operand.vmem [shape: f32[24,8], index: 2, kind: input, shape index: {}]
  %s3 = inlined_call_operand.vmem [shape: f32[8,8], index: 3, kind: input, shape index: {}]
  %s4 = inlined_call_operand.vmem [shape: f32[1,8], index: 4, kind: input, shape index: {}]
  %s5 = inlined_call_operand.vmem [shape: f32[1,8], index: 5, kind: input, shape index: {}]
  %s6 = inlined_call_operand.<no memory space> [shape: f32[1], index: 6, kind: input, shape index: {}]
  %s7 = inlined_call_operand.hbm [shape: f32[1,128], index: 7, kind: output, shape index: {}]
  %s8 = sld [smem:[#allocation0]]
  $region38: #{tpu_custom_call.1} parent=0
    _
  %s10 = ssub.s32 1, %s8
  %s11 = scalar_select 0, %s10, %s8
  %12 = sst [smem:[#allocation2]] %s6
  $region1: #{tpu_custom_call.1} parent=0
    #allocation3 [shape = 'u8[512]{0}', space=vmem, size = 0x400, scoped, tag = 'output window, operand 0, single buffered']
    #allocation4 [shape = 's32[1]{0}', space=sflag, size = 0x4, scoped, tag = 'scoped memory for tpu_custom_call.1']
    %13 = vsyncpa [#allocation4], 0
    // Predicated region
    $region2: #{tpu_custom_call.1} parent=1 // pred_check
      _
    $region3: #{tpu_custom_call.1} parent=1 // pred_check_branch
      %15 = sbr.rel (0) target = $region5
    $region4: #{tpu_custom_call.1} parent=1 // pred_region
      _
    $region5: #{tpu_custom_call.1} parent=1 // pred_fallthru
      _
    // Predicated region
    $region6: #{tpu_custom_call.1} parent=1 // pred_check
      _
    $region7: #{tpu_custom_call.1} parent=1 // pred_check_branch
      %17 = sbr.rel (0) target = $region9
    $region8: #{tpu_custom_call.1} parent=1 // pred_region
      _
    $region9: #{tpu_custom_call.1} parent=1 // pred_fallthru
      _
    // Predicated region
    $region10: #{tpu_custom_call.1} parent=1 // pred_check
      _
    $region11: #{tpu_custom_call.1} parent=1 // pred_check_branch
      %19 = sbr.rel (0) target = $region13
    $region12: #{tpu_custom_call.1} parent=1 // pred_region
      _
    $region13: #{tpu_custom_call.1} parent=1 // pred_fallthru
      _
    // Predicated region
    $region14: #{tpu_custom_call.1} parent=1 // pred_check
      _
    $region15: #{tpu_custom_call.1} parent=1 // pred_check_branch
      %21 = sbr.rel (0) target = $region17
    $region16: #{tpu_custom_call.1} parent=1 // pred_region
      _
    $region17: #{tpu_custom_call.1} parent=1 // pred_fallthru
      _
    // Predicated region
    $region18: #{tpu_custom_call.1} parent=1 // pred_check
      _
    $region19: #{tpu_custom_call.1} parent=1 // pred_check_branch
      %23 = sbr.rel (0) target = $region21
    $region20: #{tpu_custom_call.1} parent=1 // pred_region
      _
    $region21: #{tpu_custom_call.1} parent=1 // pred_fallthru
      _
    // Predicated region
    $region22: #{tpu_custom_call.1} parent=1 // pred_check
      _
    $region23: #{tpu_custom_call.1} parent=1 // pred_check_branch
      %25 = sbr.rel (0) target = $region25
    $region24: #{tpu_custom_call.1} parent=1 // pred_region
      _
    $region25: #{tpu_custom_call.1} parent=1 // pred_fallthru
      _
    // Predicated region
    $region26: #{tpu_custom_call.1} parent=1 // pred_check
      _
    $region27: #{tpu_custom_call.1} parent=1 // pred_check_branch
      %27 = sbr.rel (0) target = $region29
    $region28: #{tpu_custom_call.1} parent=1 // pred_region
      _
    $region29: #{tpu_custom_call.1} parent=1 // pred_fallthru
      _
    %v28 = vld [vmem:[%s0] sm:$0xff]
    %v29 = vld [vmem:[%s0 + $0x8] sm:$0xff]
    %v30 = vld [vmem:[%s0 + $0x10] sm:$0xff]
    %v31 = vld [vmem:[%s0 + $0x18] sm:$0xff]
    %v32 = vld [vmem:[%s0 + $0x20] sm:$0xff]
    %v33 = vld [vmem:[%s0 + $0x28] sm:$0xff]
    %v34 = vld [vmem:[%s0 + $0x30] sm:$0xff]
    %v35 = vld [vmem:[%s0 + $0x38] sm:$0xff]
    %v36 = vld [vmem:[%s0 + $0x40] sm:$0xff]
    %v37 = vld [vmem:[%s0 + $0x48] sm:$0xff]
    %v38 = vld [vmem:[%s0 + $0x50] sm:$0xff]
    %v39 = vld [vmem:[%s0 + $0x58] sm:$0xff]
    %v40 = vld [vmem:[%s0 + $0x60] sm:$0xff]
    %v41 = vld [vmem:[%s0 + $0x68] sm:$0xff]
    %v42 = vld [vmem:[%s0 + $0x70] sm:$0xff]
    %v43 = vld [vmem:[%s0 + $0x78] sm:$0xff]
    %v44 = vld [vmem:[%s2] sm:$0xff]
    %v45 = vld [vmem:[%s2 + $0x8] sm:$0xff]
    %v46 = vld [vmem:[%s2 + $0x10] sm:$0xff]
    %v47 = vld [vmem:[%s1] sm:$0xff]
    %v48 = vld [vmem:[%s1 + $0x8] sm:$0xff]
    %v49 = vld [vmem:[%s1 + $0x10] sm:$0xff]
    %v50 = vld [vmem:[%s1 + $0x18] sm:$0xff]
    %v51 = vld [vmem:[%s1 + $0x20] sm:$0xff]
    %v52 = vld [vmem:[%s1 + $0x28] sm:$0xff]
    %v53 = vld [vmem:[%s1 + $0x30] sm:$0xff]
    %v54 = vld [vmem:[%s1 + $0x38] sm:$0xff]
    %v55 = vld [vmem:[%s1 + $0x40] sm:$0xff]
    %v56 = vld [vmem:[%s1 + $0x48] sm:$0xff]
    %v57 = vld [vmem:[%s1 + $0x50] sm:$0xff]
    %v58 = vld [vmem:[%s1 + $0x58] sm:$0xff]
    %v59 = vld [vmem:[%s1 + $0x60] sm:$0xff]
    %v60 = vld [vmem:[%s1 + $0x68] sm:$0xff]
    %v61 = vld [vmem:[%s1 + $0x70] sm:$0xff]
    %v62 = vld [vmem:[%s1 + $0x78] sm:$0xff]
    %v63 = vld [vmem:[%s3] sm:$0xff]
    %vm64 = vcmask 64512
    %v66 = vsel %vm64, %v47, 0
    %v69 = vsel %vm64, %v48, 0
    %v72 = vsel %vm64, %v49, 0
    %v75 = vsel %vm64, %v50, 0
    %v78 = vsel %vm64, %v51, 0
    %v81 = vsel %vm64, %v52, 0
    %v84 = vsel %vm64, %v53, 0
    %v87 = vsel %vm64, %v54, 0
    %v90 = vsel %vm64, %v55, 0
    %v93 = vsel %vm64, %v56, 0
    %v96 = vsel %vm64, %v57, 0
    %v99 = vsel %vm64, %v58, 0
    %v102 = vsel %vm64, %v59, 0
    %v105 = vsel %vm64, %v60, 0
    %v108 = vsel %vm64, %v61, 0
    %v111 = vsel %vm64, %v62, 0
    %113 = vmatprep.subr.mxu0 0.0
    %114 = vmatpush1.msra.mxu0 %v63
    %115 = vmatprep.subr.mxu0 0.0
    %116 = vmatpush1.msra.mxu0 0.0
    %117 = vmatprep.subr.mxu0 0.0
    %118 = vmatpush1.msra.mxu0 0.0
    %119 = vmatprep.subr.mxu0 0.0
    %120 = vmatpush1.msra.mxu0 0.0
    %121 = vmatprep.subr.mxu0 0.0
    %122 = vmatpush1.msra.mxu0 0.0
    %123 = vmatprep.subr.mxu0 0.0
    %124 = vmatpush1.msra.mxu0 0.0
    %125 = vmatprep.subr.mxu0 0.0
    %126 = vmatpush1.msra.mxu0 0.0
    %127 = vmatprep.subr.mxu0 0.0
    %128 = vmatpush1.msra.mxu0 0.0
    %129 = vmatprep.subr.mxu0 0.0
    %130 = vmatpush1.msra.mxu0 0.0
    %131 = vmatprep.subr.mxu0 0.0
    %132 = vmatpush1.msra.mxu0 0.0
    %133 = vmatprep.subr.mxu0 0.0
    %134 = vmatpush1.msra.mxu0 0.0
    %135 = vmatprep.subr.mxu0 0.0
    %136 = vmatpush1.msra.mxu0 0.0
    %137 = vmatprep.subr.mxu0 0.0
    %138 = vmatpush1.msra.mxu0 0.0
    %139 = vmatprep.subr.mxu0 0.0
    %140 = vmatpush1.msra.mxu0 0.0
    %141 = vmatprep.subr.mxu0 0.0
    %142 = vmatpush1.msra.mxu0 0.0
    %143 = vmatprep.subr.mxu0 0.0
    %144 = vmatpush1.msra.mxu0 0.0
    %145 = vmatprep.subr.mxu0 0.0
    %146 = vmatpush1.msra.mxu0 0.0
    %147 = vmatprep.subr.mxu0 0.0
    %148 = vmatpush1.msra.mxu0 0.0
    %149 = vmatprep.subr.mxu0 0.0
    %150 = vmatpush1.msra.mxu0 0.0
    %151 = vmatprep.subr.mxu0 0.0
    %152 = vmatpush1.msra.mxu0 0.0
    %153 = vmatprep.subr.mxu0 0.0
    %154 = vmatpush1.msra.mxu0 0.0
    %155 = vmatprep.subr.mxu0 0.0
    %156 = vmatpush1.msra.mxu0 0.0
    %157 = vmatprep.subr.mxu0 0.0
    %158 = vmatpush1.msra.mxu0 0.0
    %159 = vmatprep.subr.mxu0 0.0
    %160 = vmatpush1.msra.mxu0 0.0
    %161 = vmatprep.subr.mxu0 0.0
    %162 = vmatpush1.msra.mxu0 0.0
    %163 = vmatprep.subr.mxu0 0.0
    %164 = vmatpush1.msra.mxu0 0.0
    %165 = vmatprep.subr.mxu0 0.0
    %166 = vmatpush1.msra.mxu0 0.0
    %167 = vmatprep.subr.mxu0 0.0
    %168 = vmatpush1.msra.mxu0 0.0
    %169 = vmatprep.subr.mxu0 0.0
    %170 = vmatpush1.msra.mxu0 0.0
    %171 = vmatprep.subr.mxu0 0.0
    %172 = vmatpush1.msra.mxu0 0.0
    %173 = vmatprep.subr.mxu0 0.0
    %174 = vmatpush1.msra.mxu0 0.0
    %175 = vmatprep.subr.mxu0 0.0
    %176 = vmatpush1.msra.mxu0 0.0
    %177 = vmatprep.mubr.f32.mxu0 0.0
    %178 = vmatmul.mubr.f32.gmra.mrb[0].mxu0 %v66
    %v179 = vpop.f32.mrb[0].mxu0
    %v180 = vadd.f32 0.0, %v179
    %v181 = vpop.f32.mrb[0].mxu0
    %182 = vmatprep.mubr.f32.mxu0 0.0
    %183 = vmatmul.mubr.f32.gmra.mrb[0].mxu0 %v69
    %v184 = vpop.f32.mrb[0].mxu0
    %v185 = vadd.f32 0.0, %v184
    %v186 = vpop.f32.mrb[0].mxu0
    %187 = vmatprep.mubr.f32.mxu0 0.0
    %188 = vmatmul.mubr.f32.gmra.mrb[0].mxu0 %v72
    %v189 = vpop.f32.mrb[0].mxu0
    %v190 = vadd.f32 0.0, %v189
    %v191 = vpop.f32.mrb[0].mxu0
    %192 = vmatprep.mubr.f32.mxu0 0.0
    %193 = vmatmul.mubr.f32.gmra.mrb[0].mxu0 %v75
    %v194 = vpop.f32.mrb[0].mxu0
    %v195 = vadd.f32 0.0, %v194
    %v196 = vpop.f32.mrb[0].mxu0
    %197 = vmatprep.mubr.f32.mxu0 0.0
    %198 = vmatmul.mubr.f32.gmra.mrb[0].mxu0 %v78
    %v199 = vpop.f32.mrb[0].mxu0
    %v200 = vadd.f32 0.0, %v199
    %v201 = vpop.f32.mrb[0].mxu0
    %202 = vmatprep.mubr.f32.mxu0 0.0
    %203 = vmatmul.mubr.f32.gmra.mrb[0].mxu0 %v81
    %v204 = vpop.f32.mrb[0].mxu0
    %v205 = vadd.f32 0.0, %v204
    %v206 = vpop.f32.mrb[0].mxu0
    %207 = vmatprep.mubr.f32.mxu0 0.0
    %208 = vmatmul.mubr.f32.gmra.mrb[0].mxu0 %v84
    %v209 = vpop.f32.mrb[0].mxu0
    %v210 = vadd.f32 0.0, %v209
    %v211 = vpop.f32.mrb[0].mxu0
    %212 = vmatprep.mubr.f32.mxu0 0.0
    %213 = vmatmul.mubr.f32.gmra.mrb[0].mxu0 %v87
    %v214 = vpop.f32.mrb[0].mxu0
    %v215 = vadd.f32 0.0, %v214
    %v216 = vpop.f32.mrb[0].mxu0
    %217 = vmatprep.mubr.f32.mxu0 0.0
    %218 = vmatmul.mubr.f32.gmra.mrb[0].mxu0 %v90
    %v219 = vpop.f32.mrb[0].mxu0
    %v220 = vadd.f32 0.0, %v219
    %v221 = vpop.f32.mrb[0].mxu0
    %222 = vmatprep.mubr.f32.mxu0 0.0
    %223 = vmatmul.mubr.f32.gmra.mrb[0].mxu0 %v93
    %v224 = vpop.f32.mrb[0].mxu0
    %v225 = vadd.f32 0.0, %v224
    %v226 = vpop.f32.mrb[0].mxu0
    %227 = vmatprep.mubr.f32.mxu0 0.0
    %228 = vmatmul.mubr.f32.gmra.mrb[0].mxu0 %v96
    %v229 = vpop.f32.mrb[0].mxu0
    %v230 = vadd.f32 0.0, %v229
    %v231 = vpop.f32.mrb[0].mxu0
    %232 = vmatprep.mubr.f32.mxu0 0.0
    %233 = vmatmul.mubr.f32.gmra.mrb[0].mxu0 %v99
    %v234 = vpop.f32.mrb[0].mxu0
    %v235 = vadd.f32 0.0, %v234
    %v236 = vpop.f32.mrb[0].mxu0
    %237 = vmatprep.mubr.f32.mxu0 0.0
    %238 = vmatmul.mubr.f32.gmra.mrb[0].mxu0 %v102
    %v239 = vpop.f32.mrb[0].mxu0
    %v240 = vadd.f32 0.0, %v239
    %v241 = vpop.f32.mrb[0].mxu0
    %242 = vmatprep.mubr.f32.mxu0 0.0
    %243 = vmatmul.mubr.f32.gmra.mrb[0].mxu0 %v105
    %v244 = vpop.f32.mrb[0].mxu0
    %v245 = vadd.f32 0.0, %v244
    %v246 = vpop.f32.mrb[0].mxu0
    %247 = vmatprep.mubr.f32.mxu0 0.0
    %248 = vmatmul.mubr.f32.gmra.mrb[0].mxu0 %v108
    %v249 = vpop.f32.mrb[0].mxu0
    %v250 = vadd.f32 0.0, %v249
    %v251 = vpop.f32.mrb[0].mxu0
    %252 = vmatprep.mubr.f32.mxu0 0.0
    %253 = vmatmul.mubr.f32.gmra.mrb[0].mxu0 %v111
    %v254 = vpop.f32.mrb[0].mxu0
    %v255 = vadd.f32 0.0, %v254
    %v256 = vpop.f32.mrb[0].mxu0
    %257 = vdwg.mxu0
    %vm258 = vcmask 195584
    %v260 = vsel %vm258, %v28, 0
    %v263 = vsel %vm258, %v29, 0
    %v266 = vsel %vm258, %v30, 0
    %v269 = vsel %vm258, %v31, 0
    %v272 = vsel %vm258, %v32, 0
    %v275 = vsel %vm258, %v33, 0
    %v278 = vsel %vm258, %v34, 0
    %v281 = vsel %vm258, %v35, 0
    %v284 = vsel %vm258, %v36, 0
    %v287 = vsel %vm258, %v37, 0
    %v290 = vsel %vm258, %v38, 0
    %v293 = vsel %vm258, %v39, 0
    %v296 = vsel %vm258, %v40, 0
    %v299 = vsel %vm258, %v41, 0
    %v302 = vsel %vm258, %v42, 0
    %v305 = vsel %vm258, %v43, 0
    %307 = vmatprep.subr.mxu0 0.0
    %308 = vmatpush1.msra.mxu0 %v44
    %309 = vmatprep.subr.mxu0 0.0
    %310 = vmatpush1.msra.mxu0 %v45
    %311 = vmatprep.subr.mxu0 0.0
    %312 = vmatpush1.msra.mxu0 %v46
    %313 = vmatprep.subr.mxu0 0.0
    %314 = vmatpush1.msra.mxu0 0.0
    %315 = vmatprep.subr.mxu0 0.0
    %316 = vmatpush1.msra.mxu0 0.0
    %317 = vmatprep.subr.mxu0 0.0
    %318 = vmatpush1.msra.mxu0 0.0
    %319 = vmatprep.subr.mxu0 0.0
    %320 = vmatpush1.msra.mxu0 0.0
    %321 = vmatprep.subr.mxu0 0.0
    %322 = vmatpush1.msra.mxu0 0.0
    %323 = vmatprep.subr.mxu0 0.0
    %324 = vmatpush1.msra.mxu0 0.0
    %325 = vmatprep.subr.mxu0 0.0
    %326 = vmatpush1.msra.mxu0 0.0
    %327 = vmatprep.subr.mxu0 0.0
    %328 = vmatpush1.msra.mxu0 0.0
    %329 = vmatprep.subr.mxu0 0.0
    %330 = vmatpush1.msra.mxu0 0.0
    %331 = vmatprep.subr.mxu0 0.0
    %332 = vmatpush1.msra.mxu0 0.0
    %333 = vmatprep.subr.mxu0 0.0
    %334 = vmatpush1.msra.mxu0 0.0
    %335 = vmatprep.subr.mxu0 0.0
    %336 = vmatpush1.msra.mxu0 0.0
    %337 = vmatprep.subr.mxu0 0.0
    %338 = vmatpush1.msra.mxu0 0.0
    %339 = vmatprep.subr.mxu0 0.0
    %340 = vmatpush1.msra.mxu0 0.0
    %341 = vmatprep.subr.mxu0 0.0
    %342 = vmatpush1.msra.mxu0 0.0
    %343 = vmatprep.subr.mxu0 0.0
    %344 = vmatpush1.msra.mxu0 0.0
    %345 = vmatprep.subr.mxu0 0.0
    %346 = vmatpush1.msra.mxu0 0.0
    %347 = vmatprep.subr.mxu0 0.0
    %348 = vmatpush1.msra.mxu0 0.0
    %349 = vmatprep.subr.mxu0 0.0
    %350 = vmatpush1.msra.mxu0 0.0
    %351 = vmatprep.subr.mxu0 0.0
    %352 = vmatpush1.msra.mxu0 0.0
    %353 = vmatprep.subr.mxu0 0.0
    %354 = vmatpush1.msra.mxu0 0.0
    %355 = vmatprep.subr.mxu0 0.0
    %356 = vmatpush1.msra.mxu0 0.0
    %357 = vmatprep.subr.mxu0 0.0
    %358 = vmatpush1.msra.mxu0 0.0
    %359 = vmatprep.subr.mxu0 0.0
    %360 = vmatpush1.msra.mxu0 0.0
    %361 = vmatprep.subr.mxu0 0.0
    %362 = vmatpush1.msra.mxu0 0.0
    %363 = vmatprep.subr.mxu0 0.0
    %364 = vmatpush1.msra.mxu0 0.0
    %365 = vmatprep.subr.mxu0 0.0
    %366 = vmatpush1.msra.mxu0 0.0
    %367 = vmatprep.subr.mxu0 0.0
    %368 = vmatpush1.msra.mxu0 0.0
    %369 = vmatprep.subr.mxu0 0.0
    %370 = vmatpush1.msra.mxu0 0.0
    %371 = vmatprep.mubr.f32.mxu0 0.0
    %372 = vmatmul.mubr.f32.gmra.mrb[0].mxu0 %v260
    %v373 = vpop.f32.mrb[0].mxu0
    %v374 = vadd.f32 %v180, %v373
    %v375 = vpop.f32.mrb[0].mxu0
    %376 = vmatprep.mubr.f32.mxu0 0.0
    %377 = vmatmul.mubr.f32.gmra.mrb[0].mxu0 %v263
    %v378 = vpop.f32.mrb[0].mxu0
    %v379 = vadd.f32 %v185, %v378
    %v380 = vpop.f32.mrb[0].mxu0
    %381 = vmatprep.mubr.f32.mxu0 0.0
    %382 = vmatmul.mubr.f32.gmra.mrb[0].mxu0 %v266
    %v383 = vpop.f32.mrb[0].mxu0
    %v384 = vadd.f32 %v190, %v383
    %v385 = vpop.f32.mrb[0].mxu0
    %386 = vmatprep.mubr.f32.mxu0 0.0
    %387 = vmatmul.mubr.f32.gmra.mrb[0].mxu0 %v269
    %v388 = vpop.f32.mrb[0].mxu0
    %v389 = vadd.f32 %v195, %v388
    %v390 = vpop.f32.mrb[0].mxu0
    %391 = vmatprep.mubr.f32.mxu0 0.0
    %392 = vmatmul.mubr.f32.gmra.mrb[0].mxu0 %v272
    %v393 = vpop.f32.mrb[0].mxu0
    %v394 = vadd.f32 %v200, %v393
    %v395 = vpop.f32.mrb[0].mxu0
    %396 = vmatprep.mubr.f32.mxu0 0.0
    %397 = vmatmul.mubr.f32.gmra.mrb[0].mxu0 %v275
    %v398 = vpop.f32.mrb[0].mxu0
    %v399 = vadd.f32 %v205, %v398
    %v400 = vpop.f32.mrb[0].mxu0
    %401 = vmatprep.mubr.f32.mxu0 0.0
    %402 = vmatmul.mubr.f32.gmra.mrb[0].mxu0 %v278
    %v403 = vpop.f32.mrb[0].mxu0
    %v404 = vadd.f32 %v210, %v403
    %v405 = vpop.f32.mrb[0].mxu0
    %406 = vmatprep.mubr.f32.mxu0 0.0
    %407 = vmatmul.mubr.f32.gmra.mrb[0].mxu0 %v281
    %v408 = vpop.f32.mrb[0].mxu0
    %v409 = vadd.f32 %v215, %v408
    %v410 = vpop.f32.mrb[0].mxu0
    %411 = vmatprep.mubr.f32.mxu0 0.0
    %412 = vmatmul.mubr.f32.gmra.mrb[0].mxu0 %v284
    %v413 = vpop.f32.mrb[0].mxu0
    %v414 = vadd.f32 %v220, %v413
    %v415 = vpop.f32.mrb[0].mxu0
    %416 = vmatprep.mubr.f32.mxu0 0.0
    %417 = vmatmul.mubr.f32.gmra.mrb[0].mxu0 %v287
    %v418 = vpop.f32.mrb[0].mxu0
    %v419 = vadd.f32 %v225, %v418
    %v420 = vpop.f32.mrb[0].mxu0
    %421 = vmatprep.mubr.f32.mxu0 0.0
    %422 = vmatmul.mubr.f32.gmra.mrb[0].mxu0 %v290
    %v423 = vpop.f32.mrb[0].mxu0
    %v424 = vadd.f32 %v230, %v423
    %v425 = vpop.f32.mrb[0].mxu0
    %426 = vmatprep.mubr.f32.mxu0 0.0
    %427 = vmatmul.mubr.f32.gmra.mrb[0].mxu0 %v293
    %v428 = vpop.f32.mrb[0].mxu0
    %v429 = vadd.f32 %v235, %v428
    %v430 = vpop.f32.mrb[0].mxu0
    %431 = vmatprep.mubr.f32.mxu0 0.0
    %432 = vmatmul.mubr.f32.gmra.mrb[0].mxu0 %v296
    %v433 = vpop.f32.mrb[0].mxu0
    %v434 = vadd.f32 %v240, %v433
    %v435 = vpop.f32.mrb[0].mxu0
    %436 = vmatprep.mubr.f32.mxu0 0.0
    %437 = vmatmul.mubr.f32.gmra.mrb[0].mxu0 %v299
    %v438 = vpop.f32.mrb[0].mxu0
    %v439 = vadd.f32 %v245, %v438
    %v440 = vpop.f32.mrb[0].mxu0
    %441 = vmatprep.mubr.f32.mxu0 0.0
    %442 = vmatmul.mubr.f32.gmra.mrb[0].mxu0 %v302
    %v443 = vpop.f32.mrb[0].mxu0
    %v444 = vadd.f32 %v250, %v443
    %v445 = vpop.f32.mrb[0].mxu0
    %446 = vmatprep.mubr.f32.mxu0 0.0
    %447 = vmatmul.mubr.f32.gmra.mrb[0].mxu0 %v305
    %v448 = vpop.f32.mrb[0].mxu0
    %v449 = vadd.f32 %v255, %v448
    %v450 = vpop.f32.mrb[0].mxu0
    %451 = vdwg.mxu0
    %v452 = vld [vmem:[%s4] sm:$0x1]
    %v454 = vlaneseq
    %v455 = vshrl.u32 %v454, 7
    %v456 = vsub.s32 0, %v455
    %v457 = vrot.slane %v452, %v456
    %v459 = vadd.f32 %v374, %v457
    %v460 = vadd.f32 %v379, %v457
    %v461 = vadd.f32 %v384, %v457
    %v462 = vadd.f32 %v389, %v457
    %v463 = vadd.f32 %v394, %v457
    %v464 = vadd.f32 %v399, %v457
    %v465 = vadd.f32 %v404, %v457
    %v466 = vadd.f32 %v409, %v457
    %v467 = vadd.f32 %v414, %v457
    %v468 = vadd.f32 %v419, %v457
    %v469 = vadd.f32 %v424, %v457
    %v470 = vadd.f32 %v429, %v457
    %v471 = vadd.f32 %v434, %v457
    %v472 = vadd.f32 %v439, %v457
    %v473 = vadd.f32 %v444, %v457
    %v474 = vadd.f32 %v449, %v457
    %v475 = vmax.f32 %v459, 0.0
    %v476 = vmax.f32 %v460, 0.0
    %v477 = vmax.f32 %v461, 0.0
    %v478 = vmax.f32 %v462, 0.0
    %v479 = vmax.f32 %v463, 0.0
    %v480 = vmax.f32 %v464, 0.0
    %v481 = vmax.f32 %v465, 0.0
    %v482 = vmax.f32 %v466, 0.0
    %v483 = vmax.f32 %v467, 0.0
    %v484 = vmax.f32 %v468, 0.0
    %v485 = vmax.f32 %v469, 0.0
    %v486 = vmax.f32 %v470, 0.0
    %v487 = vmax.f32 %v471, 0.0
    %v488 = vmax.f32 %v472, 0.0
    %v489 = vmax.f32 %v473, 0.0
    %v490 = vmax.f32 %v474, 0.0
    %v491 = vld [vmem:[%s5] sm:$0x1]
    %v493 = vlaneseq
    %v494 = vshrl.u32 %v493, 7
    %v495 = vsub.s32 0, %v494
    %v496 = vrot.slane %v491, %v495
    %v498 = vmul.f32 %v475, %v496
    %v499 = vmul.f32 %v476, %v496
    %v500 = vmul.f32 %v477, %v496
    %v501 = vmul.f32 %v478, %v496
    %v502 = vmul.f32 %v479, %v496
    %v503 = vmul.f32 %v480, %v496
    %v504 = vmul.f32 %v481, %v496
    %v505 = vmul.f32 %v482, %v496
    %v506 = vmul.f32 %v483, %v496
    %v507 = vmul.f32 %v484, %v496
    %v508 = vmul.f32 %v485, %v496
    %v509 = vmul.f32 %v486, %v496
    %v510 = vmul.f32 %v487, %v496
    %v511 = vmul.f32 %v488, %v496
    %v512 = vmul.f32 %v489, %v496
    %v513 = vmul.f32 %v490, %v496
    %v514 = vsel %vm64, %v498, 0.0
    %515 = vadd.xlane.f32.xlu0 %v514
    %v516 = vpop.xlane.xlu0 %515
    %v517 = vsel %vm64, %v499, 0.0
    %518 = vadd.xlane.f32.xlu0 %v517
    %v519 = vpop.xlane.xlu0 %518
    %v520 = vsel %vm64, %v500, 0.0
    %521 = vadd.xlane.f32.xlu0 %v520
    %v522 = vpop.xlane.xlu0 %521
    %v523 = vsel %vm64, %v501, 0.0
    %524 = vadd.xlane.f32.xlu0 %v523
    %v525 = vpop.xlane.xlu0 %524
    %v526 = vsel %vm64, %v502, 0.0
    %527 = vadd.xlane.f32.xlu0 %v526
    %v528 = vpop.xlane.xlu0 %527
    %v529 = vsel %vm64, %v503, 0.0
    %530 = vadd.xlane.f32.xlu0 %v529
    %v531 = vpop.xlane.xlu0 %530
    %v532 = vsel %vm64, %v504, 0.0
    %533 = vadd.xlane.f32.xlu0 %v532
    %v534 = vpop.xlane.xlu0 %533
    %v535 = vsel %vm64, %v505, 0.0
    %536 = vadd.xlane.f32.xlu0 %v535
    %v537 = vpop.xlane.xlu0 %536
    %v538 = vsel %vm64, %v506, 0.0
    %539 = vadd.xlane.f32.xlu0 %v538
    %v540 = vpop.xlane.xlu0 %539
    %v541 = vsel %vm64, %v507, 0.0
    %542 = vadd.xlane.f32.xlu0 %v541
    %v543 = vpop.xlane.xlu0 %542
    %v544 = vsel %vm64, %v508, 0.0
    %545 = vadd.xlane.f32.xlu0 %v544
    %v546 = vpop.xlane.xlu0 %545
    %v547 = vsel %vm64, %v509, 0.0
    %548 = vadd.xlane.f32.xlu0 %v547
    %v549 = vpop.xlane.xlu0 %548
    %v550 = vsel %vm64, %v510, 0.0
    %551 = vadd.xlane.f32.xlu0 %v550
    %v552 = vpop.xlane.xlu0 %551
    %v553 = vsel %vm64, %v511, 0.0
    %554 = vadd.xlane.f32.xlu0 %v553
    %v555 = vpop.xlane.xlu0 %554
    %v556 = vsel %vm64, %v512, 0.0
    %557 = vadd.xlane.f32.xlu0 %v556
    %v558 = vpop.xlane.xlu0 %557
    %v559 = vsel %vm64, %v513, 0.0
    %560 = vadd.xlane.f32.xlu0 %v559
    %v561 = vpop.xlane.xlu0 %560
    %s562 = sld [smem:[#allocation2]]
    %v563 = vstv %s562
    %v564 = vadd.f32 %v516, %v563
    %v565 = vadd.f32 %v519, %v563
    %v566 = vadd.f32 %v522, %v563
    %v567 = vadd.f32 %v525, %v563
    %v568 = vadd.f32 %v528, %v563
    %v569 = vadd.f32 %v531, %v563
    %v570 = vadd.f32 %v534, %v563
    %v571 = vadd.f32 %v537, %v563
    %v572 = vadd.f32 %v540, %v563
    %v573 = vadd.f32 %v543, %v563
    %v574 = vadd.f32 %v546, %v563
    %v575 = vadd.f32 %v549, %v563
    %v576 = vadd.f32 %v552, %v563
    %v577 = vadd.f32 %v555, %v563
    %v578 = vadd.f32 %v558, %v563
    %v579 = vadd.f32 %v561, %v563
    %v580 = vxor.u32 %v564, 2147483648
    %v581 = vxor.u32 %v565, 2147483648
    %v582 = vxor.u32 %v566, 2147483648
    %v583 = vxor.u32 %v567, 2147483648
    %v584 = vxor.u32 %v568, 2147483648
    %v585 = vxor.u32 %v569, 2147483648
    %v586 = vxor.u32 %v570, 2147483648
    %v587 = vxor.u32 %v571, 2147483648
    %v588 = vxor.u32 %v572, 2147483648
    %v589 = vxor.u32 %v573, 2147483648
    %v590 = vxor.u32 %v574, 2147483648
    %v591 = vxor.u32 %v575, 2147483648
    %v592 = vxor.u32 %v576, 2147483648
    %v593 = vxor.u32 %v577, 2147483648
    %v594 = vxor.u32 %v578, 2147483648
    %v595 = vxor.u32 %v579, 2147483648
    %v596 = vmul.f32 %v580, 1.442695
    %v597 = vpow.pop %v596
    %v598 = vmul.f32 %v581, 1.442695
    %v599 = vpow.pop %v598
    %v600 = vmul.f32 %v582, 1.442695
    %v601 = vpow.pop %v600
    %v602 = vmul.f32 %v583, 1.442695
    %v603 = vpow.pop %v602
    %v604 = vmul.f32 %v584, 1.442695
    %v605 = vpow.pop %v604
    %v606 = vmul.f32 %v585, 1.442695
    %v607 = vpow.pop %v606
    %v608 = vmul.f32 %v586, 1.442695
    %v609 = vpow.pop %v608
    %v610 = vmul.f32 %v587, 1.442695
    %v611 = vpow.pop %v610
    %v612 = vmul.f32 %v588, 1.442695
    %v613 = vpow.pop %v612
    %v614 = vmul.f32 %v589, 1.442695
    %v615 = vpow.pop %v614
    %v616 = vmul.f32 %v590, 1.442695
    %v617 = vpow.pop %v616
    %v618 = vmul.f32 %v591, 1.442695
    %v619 = vpow.pop %v618
    %v620 = vmul.f32 %v592, 1.442695
    %v621 = vpow.pop %v620
    %v622 = vmul.f32 %v593, 1.442695
    %v623 = vpow.pop %v622
    %v624 = vmul.f32 %v594, 1.442695
    %v625 = vpow.pop %v624
    %v626 = vmul.f32 %v595, 1.442695
    %v627 = vpow.pop %v626
    %v628 = vadd.f32 %v597, 1.0
    %v629 = vadd.f32 %v599, 1.0
    %v630 = vadd.f32 %v601, 1.0
    %v631 = vadd.f32 %v603, 1.0
    %v632 = vadd.f32 %v605, 1.0
    %v633 = vadd.f32 %v607, 1.0
    %v634 = vadd.f32 %v609, 1.0
    %v635 = vadd.f32 %v611, 1.0
    %v636 = vadd.f32 %v613, 1.0
    %v637 = vadd.f32 %v615, 1.0
    %v638 = vadd.f32 %v617, 1.0
    %v639 = vadd.f32 %v619, 1.0
    %v640 = vadd.f32 %v621, 1.0
    %v641 = vadd.f32 %v623, 1.0
    %v642 = vadd.f32 %v625, 1.0
    %v643 = vadd.f32 %v627, 1.0
    %v644 = vrcp.pop %v628
    %v645 = vmul.f32 1.0, %v644
    %v646 = vrcp.pop %v629
    %v647 = vmul.f32 1.0, %v646
    %v648 = vrcp.pop %v630
    %v649 = vmul.f32 1.0, %v648
    %v650 = vrcp.pop %v631
    %v651 = vmul.f32 1.0, %v650
    %v652 = vrcp.pop %v632
    %v653 = vmul.f32 1.0, %v652
    %v654 = vrcp.pop %v633
    %v655 = vmul.f32 1.0, %v654
    %v656 = vrcp.pop %v634
    %v657 = vmul.f32 1.0, %v656
    %v658 = vrcp.pop %v635
    %v659 = vmul.f32 1.0, %v658
    %v660 = vrcp.pop %v636
    %v661 = vmul.f32 1.0, %v660
    %v662 = vrcp.pop %v637
    %v663 = vmul.f32 1.0, %v662
    %v664 = vrcp.pop %v638
    %v665 = vmul.f32 1.0, %v664
    %v666 = vrcp.pop %v639
    %v667 = vmul.f32 1.0, %v666
    %v668 = vrcp.pop %v640
    %v669 = vmul.f32 1.0, %v668
    %v670 = vrcp.pop %v641
    %v671 = vmul.f32 1.0, %v670
    %v672 = vrcp.pop %v642
    %v673 = vmul.f32 1.0, %v672
    %v674 = vrcp.pop %v643
    %v675 = vmul.f32 1.0, %v674
    %v692 = vlaneseq
    %v693 = vand.u32 %v692, 127
    %v694 = vlaneseq
    %v695 = vshrl.u32 %v694, 7
    %v696 = vsub.s32 %v693, %v695
    %v697 = vrot.slane %v645, %v696
    %v698 = vadd.s32 %v693, 4294967288
    %v699 = vlaneseq
    %v700 = vshrl.u32 %v699, 7
    %v701 = vsub.s32 %v698, %v700
    %v702 = vrot.slane %v647, %v701
    %vm703 = vcmask 130112
    %v704 = vsel %vm703, %v702, %v697
    %v705 = vadd.s32 %v693, 4294967280
    %v706 = vlaneseq
    %v707 = vshrl.u32 %v706, 7
    %v708 = vsub.s32 %v705, %v707
    %v709 = vrot.slane %v649, %v708
    %vm710 = vcmask 195712
    %v711 = vsel %vm710, %v709, %v704
    %v712 = vadd.s32 %v693, 4294967272
    %v713 = vlaneseq
    %v714 = vshrl.u32 %v713, 7
    %v715 = vsub.s32 %v712, %v714
    %v716 = vrot.slane %v651, %v715
    %vm717 = vcmask 261312
    %v718 = vsel %vm717, %v716, %v711
    %v719 = vadd.s32 %v693, 4294967264
    %v720 = vlaneseq
    %v721 = vshrl.u32 %v720, 7
    %v722 = vsub.s32 %v719, %v721
    %v723 = vrot.slane %v653, %v722
    %vm724 = vcmask 326912
    %v725 = vsel %vm724, %v723, %v718
    %v726 = vadd.s32 %v693, 4294967256
    %v727 = vlaneseq
    %v728 = vshrl.u32 %v727, 7
    %v729 = vsub.s32 %v726, %v728
    %v730 = vrot.slane %v655, %v729
    %vm731 = vcmask 392512
    %v732 = vsel %vm731, %v730, %v725
    %v733 = vadd.s32 %v693, 4294967248
    %v734 = vlaneseq
    %v735 = vshrl.u32 %v734, 7
    %v736 = vsub.s32 %v733, %v735
    %v737 = vrot.slane %v657, %v736
    %vm738 = vcmask 458112
    %v739 = vsel %vm738, %v737, %v732
    %v740 = vadd.s32 %v693, 4294967240
    %v741 = vlaneseq
    %v742 = vshrl.u32 %v741, 7
    %v743 = vsub.s32 %v740, %v742
    %v744 = vrot.slane %v659, %v743
    %vm745 = vcmask 523712
    %v746 = vsel %vm745, %v744, %v739
    %v747 = vadd.s32 %v693, 4294967232
    %v748 = vlaneseq
    %v749 = vshrl.u32 %v748, 7
    %v750 = vsub.s32 %v747, %v749
    %v751 = vrot.slane %v661, %v750
    %vm752 = vcmask 589312
    %v753 = vsel %vm752, %v751, %v746
    %v754 = vadd.s32 %v693, 4294967224
    %v755 = vlaneseq
    %v756 = vshrl.u32 %v755, 7
    %v757 = vsub.s32 %v754, %v756
    %v758 = vrot.slane %v663, %v757
    %vm759 = vcmask 654912
    %v760 = vsel %vm759, %v758, %v753
    %v761 = vadd.s32 %v693, 4294967216
    %v762 = vlaneseq
    %v763 = vshrl.u32 %v762, 7
    %v764 = vsub.s32 %v761, %v763
    %v765 = vrot.slane %v665, %v764
    %vm766 = vcmask 720512
    %v767 = vsel %vm766, %v765, %v760
    %v768 = vadd.s32 %v693, 4294967208
    %v769 = vlaneseq
    %v770 = vshrl.u32 %v769, 7
    %v771 = vsub.s32 %v768, %v770
    %v772 = vrot.slane %v667, %v771
    %vm773 = vcmask 786112
    %v774 = vsel %vm773, %v772, %v767
    %v775 = vadd.s32 %v693, 4294967200
    %v776 = vlaneseq
    %v777 = vshrl.u32 %v776, 7
    %v778 = vsub.s32 %v775, %v777
    %v779 = vrot.slane %v669, %v778
    %vm780 = vcmask 851712
    %v781 = vsel %vm780, %v779, %v774
    %v782 = vadd.s32 %v693, 4294967192
    %v783 = vlaneseq
    %v784 = vshrl.u32 %v783, 7
    %v785 = vsub.s32 %v782, %v784
    %v786 = vrot.slane %v671, %v785
    %vm787 = vcmask 917312
    %v788 = vsel %vm787, %v786, %v781
    %v789 = vadd.s32 %v693, 4294967184
    %v790 = vlaneseq
    %v791 = vshrl.u32 %v790, 7
    %v792 = vsub.s32 %v789, %v791
    %v793 = vrot.slane %v673, %v792
    %vm794 = vcmask 982912
    %v795 = vsel %vm794, %v793, %v788
    %v796 = vadd.s32 %v693, 4294967176
    %v797 = vlaneseq
    %v798 = vshrl.u32 %v797, 7
    %v799 = vsub.s32 %v796, %v798
    %v800 = vrot.slane %v675, %v799
    %vm801 = vcmask 1048512
    %v802 = vsel %vm801, %v800, %v795
    %804 = vst [vmem:[#allocation3] sm:$0x1] %v802
    // Predicated region
    $region30: #{tpu_custom_call.1} parent=1 // pred_check
      _
    $region31: #{tpu_custom_call.1} parent=1 // pred_check_branch
      %806 = sbr.rel (0) target = $region33
    $region32: #{tpu_custom_call.1} parent=1 // pred_region
      %s808 = ssub.s32 16, 16
      %809 = vsyncadd [#allocation4], %s808
      %s811 = sshll.u32 [#allocation3], 4
      %s812 = int_to_ptr.vmem [resolvable:$true] %s811
      %814 = dma.vmem_to_hbm [thread:$0]  %s812, 16, %s7, [#allocation4]
    $region33: #{tpu_custom_call.1} parent=1 // pred_fallthru
      _
    // Predicated region
    $region34: #{tpu_custom_call.1} parent=1 // pred_check
      _
    $region35: #{tpu_custom_call.1} parent=1 // pred_check_branch
      %816 = sbr.rel (0) target = $region37
    $region36: #{tpu_custom_call.1} parent=1 // pred_region
      %817 = dma.done [#allocation4], 16
    $region37: #{tpu_custom_call.1} parent=1 // pred_fallthru
      _
    %818 = vsyncpa [#allocation4], 1

// kernel: tpu_custom_call.1
$region0: #{tpu_custom_call.1}
  #allocation0 [shape = 'u32[]', space=smem, size = 0x4, offset = 0x4, fixed_abs, tag = 'smem constant byte address 0x4 - core index']
  #allocation1 [shape = 'u32[144,128]{1,0:T(1,128)}', space=vmem, size = 0x12000, scoped, tag = 'internal scratch']
  #allocation2 [shape = 'f32[1]{0:T(128)S(6)}', space=smem, size = 0x200, scoped, tag = 'scoped memory for tpu_custom_call.1']
  %s0 = inlined_call_operand.vmem [shape: f32[8,24], index: 0, kind: input, shape index: {}]
  %s1 = inlined_call_operand.vmem [shape: f32[8,8], index: 1, kind: input, shape index: {}]
  %s2 = inlined_call_operand.vmem [shape: f32[24,8], index: 2, kind: input, shape index: {}]
  %s3 = inlined_call_operand.vmem [shape: f32[8,8], index: 3, kind: input, shape index: {}]
  %s4 = inlined_call_operand.vmem [shape: f32[1,8], index: 4, kind: input, shape index: {}]
  %s5 = inlined_call_operand.vmem [shape: f32[1,8], index: 5, kind: input, shape index: {}]
  %s6 = inlined_call_operand.<no memory space> [shape: f32[1], index: 6, kind: input, shape index: {}]
  %s7 = inlined_call_operand.hbm [shape: f32[1,128], index: 7, kind: output, shape index: {}]
  %s8 = sld [smem:[#allocation0]]
  $region38: #{tpu_custom_call.1} parent=0
    _
  %s10 = ssub.s32 1, %s8
  %s11 = scalar_select 0, %s10, %s8
  %12 = sst [smem:[#allocation2]] %s6
  $region1: #{tpu_custom_call.1} parent=0
    #allocation3 [shape = 'u8[512]{0}', space=vmem, size = 0x400, scoped, tag = 'output window, operand 0, single buffered']
    #allocation4 [shape = 's32[1]{0}', space=sflag, size = 0x4, scoped, tag = 'scoped memory for tpu_custom_call.1']
    %13 = vsyncpa [#allocation4], 0
    // Predicated region
    $region2: #{tpu_custom_call.1} parent=1 // pred_check
      _
    $region3: #{tpu_custom_call.1} parent=1 // pred_check_branch
      %15 = sbr.rel (0) target = $region5
    $region4: #{tpu_custom_call.1} parent=1 // pred_region
      _
    $region5: #{tpu_custom_call.1} parent=1 // pred_fallthru
      _
    // Predicated region
    $region6: #{tpu_custom_call.1} parent=1 // pred_check
      _
    $region7: #{tpu_custom_call.1} parent=1 // pred_check_branch
      %17 = sbr.rel (0) target = $region9
    $region8: #{tpu_custom_call.1} parent=1 // pred_region
      _
    $region9: #{tpu_custom_call.1} parent=1 // pred_fallthru
      _
    // Predicated region
    $region10: #{tpu_custom_call.1} parent=1 // pred_check
      _
    $region11: #{tpu_custom_call.1} parent=1 // pred_check_branch
      %19 = sbr.rel (0) target = $region13
    $region12: #{tpu_custom_call.1} parent=1 // pred_region
      _
    $region13: #{tpu_custom_call.1} parent=1 // pred_fallthru
      _
    // Predicated region
    $region14: #{tpu_custom_call.1} parent=1 // pred_check
      _
    $region15: #{tpu_custom_call.1} parent=1 // pred_check_branch
      %21 = sbr.rel (0) target = $region17
    $region16: #{tpu_custom_call.1} parent=1 // pred_region
      _
    $region17: #{tpu_custom_call.1} parent=1 // pred_fallthru
      _
    // Predicated region
    $region18: #{tpu_custom_call.1} parent=1 // pred_check
      _
    $region19: #{tpu_custom_call.1} parent=1 // pred_check_branch
      %23 = sbr.rel (0) target = $region21
    $region20: #{tpu_custom_call.1} parent=1 // pred_region
      _
    $region21: #{tpu_custom_call.1} parent=1 // pred_fallthru
      _
    // Predicated region
    $region22: #{tpu_custom_call.1} parent=1 // pred_check
      _
    $region23: #{tpu_custom_call.1} parent=1 // pred_check_branch
      %25 = sbr.rel (0) target = $region25
    $region24: #{tpu_custom_call.1} parent=1 // pred_region
      _
    $region25: #{tpu_custom_call.1} parent=1 // pred_fallthru
      _
    // Predicated region
    $region26: #{tpu_custom_call.1} parent=1 // pred_check
      _
    $region27: #{tpu_custom_call.1} parent=1 // pred_check_branch
      %27 = sbr.rel (0) target = $region29
    $region28: #{tpu_custom_call.1} parent=1 // pred_region
      _
    $region29: #{tpu_custom_call.1} parent=1 // pred_fallthru
      _
    %v28 = vld [vmem:[%s0] sm:$0xff]
    %v29 = vld [vmem:[%s0 + $0x8] sm:$0xff]
    %v30 = vld [vmem:[%s0 + $0x10] sm:$0xff]
    %v31 = vld [vmem:[%s0 + $0x18] sm:$0xff]
    %v32 = vld [vmem:[%s0 + $0x20] sm:$0xff]
    %v33 = vld [vmem:[%s0 + $0x28] sm:$0xff]
    %v34 = vld [vmem:[%s0 + $0x30] sm:$0xff]
    %v35 = vld [vmem:[%s0 + $0x38] sm:$0xff]
    %v36 = vld [vmem:[%s0 + $0x40] sm:$0xff]
    %v37 = vld [vmem:[%s0 + $0x48] sm:$0xff]
    %v38 = vld [vmem:[%s0 + $0x50] sm:$0xff]
    %v39 = vld [vmem:[%s0 + $0x58] sm:$0xff]
    %v40 = vld [vmem:[%s0 + $0x60] sm:$0xff]
    %v41 = vld [vmem:[%s0 + $0x68] sm:$0xff]
    %v42 = vld [vmem:[%s0 + $0x70] sm:$0xff]
    %v43 = vld [vmem:[%s0 + $0x78] sm:$0xff]
    %v44 = vld [vmem:[%s2] sm:$0xff]
    %v45 = vld [vmem:[%s2 + $0x8] sm:$0xff]
    %v46 = vld [vmem:[%s2 + $0x10] sm:$0xff]
    %v47 = vld [vmem:[%s1] sm:$0xff]
    %v48 = vld [vmem:[%s1 + $0x8] sm:$0xff]
    %v49 = vld [vmem:[%s1 + $0x10] sm:$0xff]
    %v50 = vld [vmem:[%s1 + $0x18] sm:$0xff]
    %v51 = vld [vmem:[%s1 + $0x20] sm:$0xff]
    %v52 = vld [vmem:[%s1 + $0x28] sm:$0xff]
    %v53 = vld [vmem:[%s1 + $0x30] sm:$0xff]
    %v54 = vld [vmem:[%s1 + $0x38] sm:$0xff]
    %v55 = vld [vmem:[%s1 + $0x40] sm:$0xff]
    %v56 = vld [vmem:[%s1 + $0x48] sm:$0xff]
    %v57 = vld [vmem:[%s1 + $0x50] sm:$0xff]
    %v58 = vld [vmem:[%s1 + $0x58] sm:$0xff]
    %v59 = vld [vmem:[%s1 + $0x60] sm:$0xff]
    %v60 = vld [vmem:[%s1 + $0x68] sm:$0xff]
    %v61 = vld [vmem:[%s1 + $0x70] sm:$0xff]
    %v62 = vld [vmem:[%s1 + $0x78] sm:$0xff]
    %v63 = vld [vmem:[%s3] sm:$0xff]
    %vm64 = vcmask 64512
    %v66 = vsel %vm64, %v47, 0
    %v69 = vsel %vm64, %v48, 0
    %v72 = vsel %vm64, %v49, 0
    %v75 = vsel %vm64, %v50, 0
    %v78 = vsel %vm64, %v51, 0
    %v81 = vsel %vm64, %v52, 0
    %v84 = vsel %vm64, %v53, 0
    %v87 = vsel %vm64, %v54, 0
    %v90 = vsel %vm64, %v55, 0
    %v93 = vsel %vm64, %v56, 0
    %v96 = vsel %vm64, %v57, 0
    %v99 = vsel %vm64, %v58, 0
    %v102 = vsel %vm64, %v59, 0
    %v105 = vsel %vm64, %v60, 0
    %v108 = vsel %vm64, %v61, 0
    %v111 = vsel %vm64, %v62, 0
    %113 = vmatprep.subr.mxu0 0.0
    %114 = vmatpush1.msra.mxu0 %v63
    %115 = vmatprep.subr.mxu0 0.0
    %116 = vmatpush1.msra.mxu0 0.0
    %117 = vmatprep.subr.mxu0 0.0
    %118 = vmatpush1.msra.mxu0 0.0
    %119 = vmatprep.subr.mxu0 0.0
    %120 = vmatpush1.msra.mxu0 0.0
    %121 = vmatprep.subr.mxu0 0.0
    %122 = vmatpush1.msra.mxu0 0.0
    %123 = vmatprep.subr.mxu0 0.0
    %124 = vmatpush1.msra.mxu0 0.0
    %125 = vmatprep.subr.mxu0 0.0
    %126 = vmatpush1.msra.mxu0 0.0
    %127 = vmatprep.subr.mxu0 0.0
    %128 = vmatpush1.msra.mxu0 0.0
    %129 = vmatprep.subr.mxu0 0.0
    %130 = vmatpush1.msra.mxu0 0.0
    %131 = vmatprep.subr.mxu0 0.0
    %132 = vmatpush1.msra.mxu0 0.0
    %133 = vmatprep.subr.mxu0 0.0
    %134 = vmatpush1.msra.mxu0 0.0
    %135 = vmatprep.subr.mxu0 0.0
    %136 = vmatpush1.msra.mxu0 0.0
    %137 = vmatprep.subr.mxu0 0.0
    %138 = vmatpush1.msra.mxu0 0.0
    %139 = vmatprep.subr.mxu0 0.0
    %140 = vmatpush1.msra.mxu0 0.0
    %141 = vmatprep.subr.mxu0 0.0
    %142 = vmatpush1.msra.mxu0 0.0
    %143 = vmatprep.subr.mxu0 0.0
    %144 = vmatpush1.msra.mxu0 0.0
    %145 = vmatprep.subr.mxu0 0.0
    %146 = vmatpush1.msra.mxu0 0.0
    %147 = vmatprep.subr.mxu0 0.0
    %148 = vmatpush1.msra.mxu0 0.0
    %149 = vmatprep.subr.mxu0 0.0
    %150 = vmatpush1.msra.mxu0 0.0
    %151 = vmatprep.subr.mxu0 0.0
    %152 = vmatpush1.msra.mxu0 0.0
    %153 = vmatprep.subr.mxu0 0.0
    %154 = vmatpush1.msra.mxu0 0.0
    %155 = vmatprep.subr.mxu0 0.0
    %156 = vmatpush1.msra.mxu0 0.0
    %157 = vmatprep.subr.mxu0 0.0
    %158 = vmatpush1.msra.mxu0 0.0
    %159 = vmatprep.subr.mxu0 0.0
    %160 = vmatpush1.msra.mxu0 0.0
    %161 = vmatprep.subr.mxu0 0.0
    %162 = vmatpush1.msra.mxu0 0.0
    %163 = vmatprep.subr.mxu0 0.0
    %164 = vmatpush1.msra.mxu0 0.0
    %165 = vmatprep.subr.mxu0 0.0
    %166 = vmatpush1.msra.mxu0 0.0
    %167 = vmatprep.subr.mxu0 0.0
    %168 = vmatpush1.msra.mxu0 0.0
    %169 = vmatprep.subr.mxu0 0.0
    %170 = vmatpush1.msra.mxu0 0.0
    %171 = vmatprep.subr.mxu0 0.0
    %172 = vmatpush1.msra.mxu0 0.0
    %173 = vmatprep.subr.mxu0 0.0
    %174 = vmatpush1.msra.mxu0 0.0
    %175 = vmatprep.subr.mxu0 0.0
    %176 = vmatpush1.msra.mxu0 0.0
    %177 = vmatprep.mubr.f32.mxu0 0.0
    %178 = vmatmul.mubr.f32.gmra.mrb[0].mxu0 %v66
    %v179 = vpop.f32.mrb[0].mxu0
    %v180 = vadd.f32 0.0, %v179
    %v181 = vpop.f32.mrb[0].mxu0
    %182 = vmatprep.mubr.f32.mxu0 0.0
    %183 = vmatmul.mubr.f32.gmra.mrb[0].mxu0 %v69
    %v184 = vpop.f32.mrb[0].mxu0
    %v185 = vadd.f32 0.0, %v184
    %v186 = vpop.f32.mrb[0].mxu0
    %187 = vmatprep.mubr.f32.mxu0 0.0
    %188 = vmatmul.mubr.f32.gmra.mrb[0].mxu0 %v72
    %v189 = vpop.f32.mrb[0].mxu0
    %v190 = vadd.f32 0.0, %v189
    %v191 = vpop.f32.mrb[0].mxu0
    %192 = vmatprep.mubr.f32.mxu0 0.0
    %193 = vmatmul.mubr.f32.gmra.mrb[0].mxu0 %v75
    %v194 = vpop.f32.mrb[0].mxu0
    %v195 = vadd.f32 0.0, %v194
    %v196 = vpop.f32.mrb[0].mxu0
    %197 = vmatprep.mubr.f32.mxu0 0.0
    %198 = vmatmul.mubr.f32.gmra.mrb[0].mxu0 %v78
    %v199 = vpop.f32.mrb[0].mxu0
    %v200 = vadd.f32 0.0, %v199
    %v201 = vpop.f32.mrb[0].mxu0
    %202 = vmatprep.mubr.f32.mxu0 0.0
    %203 = vmatmul.mubr.f32.gmra.mrb[0].mxu0 %v81
    %v204 = vpop.f32.mrb[0].mxu0
    %v205 = vadd.f32 0.0, %v204
    %v206 = vpop.f32.mrb[0].mxu0
    %207 = vmatprep.mubr.f32.mxu0 0.0
    %208 = vmatmul.mubr.f32.gmra.mrb[0].mxu0 %v84
    %v209 = vpop.f32.mrb[0].mxu0
    %v210 = vadd.f32 0.0, %v209
    %v211 = vpop.f32.mrb[0].mxu0
    %212 = vmatprep.mubr.f32.mxu0 0.0
    %213 = vmatmul.mubr.f32.gmra.mrb[0].mxu0 %v87
    %v214 = vpop.f32.mrb[0].mxu0
    %v215 = vadd.f32 0.0, %v214
    %v216 = vpop.f32.mrb[0].mxu0
    %217 = vmatprep.mubr.f32.mxu0 0.0
    %218 = vmatmul.mubr.f32.gmra.mrb[0].mxu0 %v90
    %v219 = vpop.f32.mrb[0].mxu0
    %v220 = vadd.f32 0.0, %v219
    %v221 = vpop.f32.mrb[0].mxu0
    %222 = vmatprep.mubr.f32.mxu0 0.0
    %223 = vmatmul.mubr.f32.gmra.mrb[0].mxu0 %v93
    %v224 = vpop.f32.mrb[0].mxu0
    %v225 = vadd.f32 0.0, %v224
    %v226 = vpop.f32.mrb[0].mxu0
    %227 = vmatprep.mubr.f32.mxu0 0.0
    %228 = vmatmul.mubr.f32.gmra.mrb[0].mxu0 %v96
    %v229 = vpop.f32.mrb[0].mxu0
    %v230 = vadd.f32 0.0, %v229
    %v231 = vpop.f32.mrb[0].mxu0
    %232 = vmatprep.mubr.f32.mxu0 0.0
    %233 = vmatmul.mubr.f32.gmra.mrb[0].mxu0 %v99
    %v234 = vpop.f32.mrb[0].mxu0
    %v235 = vadd.f32 0.0, %v234
    %v236 = vpop.f32.mrb[0].mxu0
    %237 = vmatprep.mubr.f32.mxu0 0.0
    %238 = vmatmul.mubr.f32.gmra.mrb[0].mxu0 %v102
    %v239 = vpop.f32.mrb[0].mxu0
    %v240 = vadd.f32 0.0, %v239
    %v241 = vpop.f32.mrb[0].mxu0
    %242 = vmatprep.mubr.f32.mxu0 0.0
    %243 = vmatmul.mubr.f32.gmra.mrb[0].mxu0 %v105
    %v244 = vpop.f32.mrb[0].mxu0
    %v245 = vadd.f32 0.0, %v244
    %v246 = vpop.f32.mrb[0].mxu0
    %247 = vmatprep.mubr.f32.mxu0 0.0
    %248 = vmatmul.mubr.f32.gmra.mrb[0].mxu0 %v108
    %v249 = vpop.f32.mrb[0].mxu0
    %v250 = vadd.f32 0.0, %v249
    %v251 = vpop.f32.mrb[0].mxu0
    %252 = vmatprep.mubr.f32.mxu0 0.0
    %253 = vmatmul.mubr.f32.gmra.mrb[0].mxu0 %v111
    %v254 = vpop.f32.mrb[0].mxu0
    %v255 = vadd.f32 0.0, %v254
    %v256 = vpop.f32.mrb[0].mxu0
    %257 = vdwg.mxu0
    %vm258 = vcmask 195584
    %v260 = vsel %vm258, %v28, 0
    %v263 = vsel %vm258, %v29, 0
    %v266 = vsel %vm258, %v30, 0
    %v269 = vsel %vm258, %v31, 0
    %v272 = vsel %vm258, %v32, 0
    %v275 = vsel %vm258, %v33, 0
    %v278 = vsel %vm258, %v34, 0
    %v281 = vsel %vm258, %v35, 0
    %v284 = vsel %vm258, %v36, 0
    %v287 = vsel %vm258, %v37, 0
    %v290 = vsel %vm258, %v38, 0
    %v293 = vsel %vm258, %v39, 0
    %v296 = vsel %vm258, %v40, 0
    %v299 = vsel %vm258, %v41, 0
    %v302 = vsel %vm258, %v42, 0
    %v305 = vsel %vm258, %v43, 0
    %307 = vmatprep.subr.mxu0 0.0
    %308 = vmatpush1.msra.mxu0 %v44
    %309 = vmatprep.subr.mxu0 0.0
    %310 = vmatpush1.msra.mxu0 %v45
    %311 = vmatprep.subr.mxu0 0.0
    %312 = vmatpush1.msra.mxu0 %v46
    %313 = vmatprep.subr.mxu0 0.0
    %314 = vmatpush1.msra.mxu0 0.0
    %315 = vmatprep.subr.mxu0 0.0
    %316 = vmatpush1.msra.mxu0 0.0
    %317 = vmatprep.subr.mxu0 0.0
    %318 = vmatpush1.msra.mxu0 0.0
    %319 = vmatprep.subr.mxu0 0.0
    %320 = vmatpush1.msra.mxu0 0.0
    %321 = vmatprep.subr.mxu0 0.0
    %322 = vmatpush1.msra.mxu0 0.0
    %323 = vmatprep.subr.mxu0 0.0
    %324 = vmatpush1.msra.mxu0 0.0
    %325 = vmatprep.subr.mxu0 0.0
    %326 = vmatpush1.msra.mxu0 0.0
    %327 = vmatprep.subr.mxu0 0.0
    %328 = vmatpush1.msra.mxu0 0.0
    %329 = vmatprep.subr.mxu0 0.0
    %330 = vmatpush1.msra.mxu0 0.0
    %331 = vmatprep.subr.mxu0 0.0
    %332 = vmatpush1.msra.mxu0 0.0
    %333 = vmatprep.subr.mxu0 0.0
    %334 = vmatpush1.msra.mxu0 0.0
    %335 = vmatprep.subr.mxu0 0.0
    %336 = vmatpush1.msra.mxu0 0.0
    %337 = vmatprep.subr.mxu0 0.0
    %338 = vmatpush1.msra.mxu0 0.0
    %339 = vmatprep.subr.mxu0 0.0
    %340 = vmatpush1.msra.mxu0 0.0
    %341 = vmatprep.subr.mxu0 0.0
    %342 = vmatpush1.msra.mxu0 0.0
    %343 = vmatprep.subr.mxu0 0.0
    %344 = vmatpush1.msra.mxu0 0.0
    %345 = vmatprep.subr.mxu0 0.0
    %346 = vmatpush1.msra.mxu0 0.0
    %347 = vmatprep.subr.mxu0 0.0
    %348 = vmatpush1.msra.mxu0 0.0
    %349 = vmatprep.subr.mxu0 0.0
    %350 = vmatpush1.msra.mxu0 0.0
    %351 = vmatprep.subr.mxu0 0.0
    %352 = vmatpush1.msra.mxu0 0.0
    %353 = vmatprep.subr.mxu0 0.0
    %354 = vmatpush1.msra.mxu0 0.0
    %355 = vmatprep.subr.mxu0 0.0
    %356 = vmatpush1.msra.mxu0 0.0
    %357 = vmatprep.subr.mxu0 0.0
    %358 = vmatpush1.msra.mxu0 0.0
    %359 = vmatprep.subr.mxu0 0.0
    %360 = vmatpush1.msra.mxu0 0.0
    %361 = vmatprep.subr.mxu0 0.0
    %362 = vmatpush1.msra.mxu0 0.0
    %363 = vmatprep.subr.mxu0 0.0
    %364 = vmatpush1.msra.mxu0 0.0
    %365 = vmatprep.subr.mxu0 0.0
    %366 = vmatpush1.msra.mxu0 0.0
    %367 = vmatprep.subr.mxu0 0.0
    %368 = vmatpush1.msra.mxu0 0.0
    %369 = vmatprep.subr.mxu0 0.0
    %370 = vmatpush1.msra.mxu0 0.0
    %371 = vmatprep.mubr.f32.mxu0 0.0
    %372 = vmatmul.mubr.f32.gmra.mrb[0].mxu0 %v260
    %v373 = vpop.f32.mrb[0].mxu0
    %v374 = vadd.f32 %v180, %v373
    %v375 = vpop.f32.mrb[0].mxu0
    %376 = vmatprep.mubr.f32.mxu0 0.0
    %377 = vmatmul.mubr.f32.gmra.mrb[0].mxu0 %v263
    %v378 = vpop.f32.mrb[0].mxu0
    %v379 = vadd.f32 %v185, %v378
    %v380 = vpop.f32.mrb[0].mxu0
    %381 = vmatprep.mubr.f32.mxu0 0.0
    %382 = vmatmul.mubr.f32.gmra.mrb[0].mxu0 %v266
    %v383 = vpop.f32.mrb[0].mxu0
    %v384 = vadd.f32 %v190, %v383
    %v385 = vpop.f32.mrb[0].mxu0
    %386 = vmatprep.mubr.f32.mxu0 0.0
    %387 = vmatmul.mubr.f32.gmra.mrb[0].mxu0 %v269
    %v388 = vpop.f32.mrb[0].mxu0
    %v389 = vadd.f32 %v195, %v388
    %v390 = vpop.f32.mrb[0].mxu0
    %391 = vmatprep.mubr.f32.mxu0 0.0
    %392 = vmatmul.mubr.f32.gmra.mrb[0].mxu0 %v272
    %v393 = vpop.f32.mrb[0].mxu0
    %v394 = vadd.f32 %v200, %v393
    %v395 = vpop.f32.mrb[0].mxu0
    %396 = vmatprep.mubr.f32.mxu0 0.0
    %397 = vmatmul.mubr.f32.gmra.mrb[0].mxu0 %v275
    %v398 = vpop.f32.mrb[0].mxu0
    %v399 = vadd.f32 %v205, %v398
    %v400 = vpop.f32.mrb[0].mxu0
    %401 = vmatprep.mubr.f32.mxu0 0.0
    %402 = vmatmul.mubr.f32.gmra.mrb[0].mxu0 %v278
    %v403 = vpop.f32.mrb[0].mxu0
    %v404 = vadd.f32 %v210, %v403
    %v405 = vpop.f32.mrb[0].mxu0
    %406 = vmatprep.mubr.f32.mxu0 0.0
    %407 = vmatmul.mubr.f32.gmra.mrb[0].mxu0 %v281
    %v408 = vpop.f32.mrb[0].mxu0
    %v409 = vadd.f32 %v215, %v408
    %v410 = vpop.f32.mrb[0].mxu0
    %411 = vmatprep.mubr.f32.mxu0 0.0
    %412 = vmatmul.mubr.f32.gmra.mrb[0].mxu0 %v284
    %v413 = vpop.f32.mrb[0].mxu0
    %v414 = vadd.f32 %v220, %v413
    %v415 = vpop.f32.mrb[0].mxu0
    %416 = vmatprep.mubr.f32.mxu0 0.0
    %417 = vmatmul.mubr.f32.gmra.mrb[0].mxu0 %v287
    %v418 = vpop.f32.mrb[0].mxu0
    %v419 = vadd.f32 %v225, %v418
    %v420 = vpop.f32.mrb[0].mxu0
    %421 = vmatprep.mubr.f32.mxu0 0.0
    %422 = vmatmul.mubr.f32.gmra.mrb[0].mxu0 %v290
    %v423 = vpop.f32.mrb[0].mxu0
    %v424 = vadd.f32 %v230, %v423
    %v425 = vpop.f32.mrb[0].mxu0
    %426 = vmatprep.mubr.f32.mxu0 0.0
    %427 = vmatmul.mubr.f32.gmra.mrb[0].mxu0 %v293
    %v428 = vpop.f32.mrb[0].mxu0
    %v429 = vadd.f32 %v235, %v428
    %v430 = vpop.f32.mrb[0].mxu0
    %431 = vmatprep.mubr.f32.mxu0 0.0
    %432 = vmatmul.mubr.f32.gmra.mrb[0].mxu0 %v296
    %v433 = vpop.f32.mrb[0].mxu0
    %v434 = vadd.f32 %v240, %v433
    %v435 = vpop.f32.mrb[0].mxu0
    %436 = vmatprep.mubr.f32.mxu0 0.0
    %437 = vmatmul.mubr.f32.gmra.mrb[0].mxu0 %v299
    %v438 = vpop.f32.mrb[0].mxu0
    %v439 = vadd.f32 %v245, %v438
    %v440 = vpop.f32.mrb[0].mxu0
    %441 = vmatprep.mubr.f32.mxu0 0.0
    %442 = vmatmul.mubr.f32.gmra.mrb[0].mxu0 %v302
    %v443 = vpop.f32.mrb[0].mxu0
    %v444 = vadd.f32 %v250, %v443
    %v445 = vpop.f32.mrb[0].mxu0
    %446 = vmatprep.mubr.f32.mxu0 0.0
    %447 = vmatmul.mubr.f32.gmra.mrb[0].mxu0 %v305
    %v448 = vpop.f32.mrb[0].mxu0
    %v449 = vadd.f32 %v255, %v448
    %v450 = vpop.f32.mrb[0].mxu0
    %451 = vdwg.mxu0
    %v452 = vld [vmem:[%s4] sm:$0x1]
    %v454 = vlaneseq
    %v455 = vshrl.u32 %v454, 7
    %v456 = vsub.s32 0, %v455
    %v457 = vrot.slane %v452, %v456
    %v459 = vadd.f32 %v374, %v457
    %v460 = vadd.f32 %v379, %v457
    %v461 = vadd.f32 %v384, %v457
    %v462 = vadd.f32 %v389, %v457
    %v463 = vadd.f32 %v394, %v457
    %v464 = vadd.f32 %v399, %v457
    %v465 = vadd.f32 %v404, %v457
    %v466 = vadd.f32 %v409, %v457
    %v467 = vadd.f32 %v414, %v457
    %v468 = vadd.f32 %v419, %v457
    %v469 = vadd.f32 %v424, %v457
    %v470 = vadd.f32 %v429, %v457
    %v471 = vadd.f32 %v434, %v457
    %v472 = vadd.f32 %v439, %v457
    %v473 = vadd.f32 %v444, %v457
    %v474 = vadd.f32 %v449, %v457
    %v475 = vmax.f32 %v459, 0.0
    %v476 = vmax.f32 %v460, 0.0
    %v477 = vmax.f32 %v461, 0.0
    %v478 = vmax.f32 %v462, 0.0
    %v479 = vmax.f32 %v463, 0.0
    %v480 = vmax.f32 %v464, 0.0
    %v481 = vmax.f32 %v465, 0.0
    %v482 = vmax.f32 %v466, 0.0
    %v483 = vmax.f32 %v467, 0.0
    %v484 = vmax.f32 %v468, 0.0
    %v485 = vmax.f32 %v469, 0.0
    %v486 = vmax.f32 %v470, 0.0
    %v487 = vmax.f32 %v471, 0.0
    %v488 = vmax.f32 %v472, 0.0
    %v489 = vmax.f32 %v473, 0.0
    %v490 = vmax.f32 %v474, 0.0
    %v491 = vld [vmem:[%s5] sm:$0x1]
    %v493 = vlaneseq
    %v494 = vshrl.u32 %v493, 7
    %v495 = vsub.s32 0, %v494
    %v496 = vrot.slane %v491, %v495
    %v498 = vmul.f32 %v475, %v496
    %v499 = vmul.f32 %v476, %v496
    %v500 = vmul.f32 %v477, %v496
    %v501 = vmul.f32 %v478, %v496
    %v502 = vmul.f32 %v479, %v496
    %v503 = vmul.f32 %v480, %v496
    %v504 = vmul.f32 %v481, %v496
    %v505 = vmul.f32 %v482, %v496
    %v506 = vmul.f32 %v483, %v496
    %v507 = vmul.f32 %v484, %v496
    %v508 = vmul.f32 %v485, %v496
    %v509 = vmul.f32 %v486, %v496
    %v510 = vmul.f32 %v487, %v496
    %v511 = vmul.f32 %v488, %v496
    %v512 = vmul.f32 %v489, %v496
    %v513 = vmul.f32 %v490, %v496
    %v514 = vsel %vm64, %v498, 0.0
    %515 = vadd.xlane.f32.xlu0 %v514
    %v516 = vpop.xlane.xlu0 %515
    %v517 = vsel %vm64, %v499, 0.0
    %518 = vadd.xlane.f32.xlu0 %v517
    %v519 = vpop.xlane.xlu0 %518
    %v520 = vsel %vm64, %v500, 0.0
    %521 = vadd.xlane.f32.xlu0 %v520
    %v522 = vpop.xlane.xlu0 %521
    %v523 = vsel %vm64, %v501, 0.0
    %524 = vadd.xlane.f32.xlu0 %v523
    %v525 = vpop.xlane.xlu0 %524
    %v526 = vsel %vm64, %v502, 0.0
    %527 = vadd.xlane.f32.xlu0 %v526
    %v528 = vpop.xlane.xlu0 %527
    %v529 = vsel %vm64, %v503, 0.0
    %530 = vadd.xlane.f32.xlu0 %v529
    %v531 = vpop.xlane.xlu0 %530
    %v532 = vsel %vm64, %v504, 0.0
    %533 = vadd.xlane.f32.xlu0 %v532
    %v534 = vpop.xlane.xlu0 %533
    %v535 = vsel %vm64, %v505, 0.0
    %536 = vadd.xlane.f32.xlu0 %v535
    %v537 = vpop.xlane.xlu0 %536
    %v538 = vsel %vm64, %v506, 0.0
    %539 = vadd.xlane.f32.xlu0 %v538
    %v540 = vpop.xlane.xlu0 %539
    %v541 = vsel %vm64, %v507, 0.0
    %542 = vadd.xlane.f32.xlu0 %v541
    %v543 = vpop.xlane.xlu0 %542
    %v544 = vsel %vm64, %v508, 0.0
    %545 = vadd.xlane.f32.xlu0 %v544
    %v546 = vpop.xlane.xlu0 %545
    %v547 = vsel %vm64, %v509, 0.0
    %548 = vadd.xlane.f32.xlu0 %v547
    %v549 = vpop.xlane.xlu0 %548
    %v550 = vsel %vm64, %v510, 0.0
    %551 = vadd.xlane.f32.xlu0 %v550
    %v552 = vpop.xlane.xlu0 %551
    %v553 = vsel %vm64, %v511, 0.0
    %554 = vadd.xlane.f32.xlu0 %v553
    %v555 = vpop.xlane.xlu0 %554
    %v556 = vsel %vm64, %v512, 0.0
    %557 = vadd.xlane.f32.xlu0 %v556
    %v558 = vpop.xlane.xlu0 %557
    %v559 = vsel %vm64, %v513, 0.0
    %560 = vadd.xlane.f32.xlu0 %v559
    %v561 = vpop.xlane.xlu0 %560
    %s562 = sld [smem:[#allocation2]]
    %v563 = vstv %s562
    %v564 = vadd.f32 %v516, %v563
    %v565 = vadd.f32 %v519, %v563
    %v566 = vadd.f32 %v522, %v563
    %v567 = vadd.f32 %v525, %v563
    %v568 = vadd.f32 %v528, %v563
    %v569 = vadd.f32 %v531, %v563
    %v570 = vadd.f32 %v534, %v563
    %v571 = vadd.f32 %v537, %v563
    %v572 = vadd.f32 %v540, %v563
    %v573 = vadd.f32 %v543, %v563
    %v574 = vadd.f32 %v546, %v563
    %v575 = vadd.f32 %v549, %v563
    %v576 = vadd.f32 %v552, %v563
    %v577 = vadd.f32 %v555, %v563
    %v578 = vadd.f32 %v558, %v563
    %v579 = vadd.f32 %v561, %v563
    %v580 = vxor.u32 %v564, 2147483648
    %v581 = vxor.u32 %v565, 2147483648
    %v582 = vxor.u32 %v566, 2147483648
    %v583 = vxor.u32 %v567, 2147483648
    %v584 = vxor.u32 %v568, 2147483648
    %v585 = vxor.u32 %v569, 2147483648
    %v586 = vxor.u32 %v570, 2147483648
    %v587 = vxor.u32 %v571, 2147483648
    %v588 = vxor.u32 %v572, 2147483648
    %v589 = vxor.u32 %v573, 2147483648
    %v590 = vxor.u32 %v574, 2147483648
    %v591 = vxor.u32 %v575, 2147483648
    %v592 = vxor.u32 %v576, 2147483648
    %v593 = vxor.u32 %v577, 2147483648
    %v594 = vxor.u32 %v578, 2147483648
    %v595 = vxor.u32 %v579, 2147483648
    %v596 = vmul.f32 %v580, 1.442695
    %v597 = vpow.pop %v596
    %v598 = vmul.f32 %v581, 1.442695
    %v599 = vpow.pop %v598
    %v600 = vmul.f32 %v582, 1.442695
    %v601 = vpow.pop %v600
    %v602 = vmul.f32 %v583, 1.442695
    %v603 = vpow.pop %v602
    %v604 = vmul.f32 %v584, 1.442695
    %v605 = vpow.pop %v604
    %v606 = vmul.f32 %v585, 1.442695
    %v607 = vpow.pop %v606
    %v608 = vmul.f32 %v586, 1.442695
    %v609 = vpow.pop %v608
    %v610 = vmul.f32 %v587, 1.442695
    %v611 = vpow.pop %v610
    %v612 = vmul.f32 %v588, 1.442695
    %v613 = vpow.pop %v612
    %v614 = vmul.f32 %v589, 1.442695
    %v615 = vpow.pop %v614
    %v616 = vmul.f32 %v590, 1.442695
    %v617 = vpow.pop %v616
    %v618 = vmul.f32 %v591, 1.442695
    %v619 = vpow.pop %v618
    %v620 = vmul.f32 %v592, 1.442695
    %v621 = vpow.pop %v620
    %v622 = vmul.f32 %v593, 1.442695
    %v623 = vpow.pop %v622
    %v624 = vmul.f32 %v594, 1.442695
    %v625 = vpow.pop %v624
    %v626 = vmul.f32 %v595, 1.442695
    %v627 = vpow.pop %v626
    %v628 = vadd.f32 %v597, 1.0
    %v629 = vadd.f32 %v599, 1.0
    %v630 = vadd.f32 %v601, 1.0
    %v631 = vadd.f32 %v603, 1.0
    %v632 = vadd.f32 %v605, 1.0
    %v633 = vadd.f32 %v607, 1.0
    %v634 = vadd.f32 %v609, 1.0
    %v635 = vadd.f32 %v611, 1.0
    %v636 = vadd.f32 %v613, 1.0
    %v637 = vadd.f32 %v615, 1.0
    %v638 = vadd.f32 %v617, 1.0
    %v639 = vadd.f32 %v619, 1.0
    %v640 = vadd.f32 %v621, 1.0
    %v641 = vadd.f32 %v623, 1.0
    %v642 = vadd.f32 %v625, 1.0
    %v643 = vadd.f32 %v627, 1.0
    %v644 = vrcp.pop %v628
    %v645 = vmul.f32 1.0, %v644
    %v646 = vrcp.pop %v629
    %v647 = vmul.f32 1.0, %v646
    %v648 = vrcp.pop %v630
    %v649 = vmul.f32 1.0, %v648
    %v650 = vrcp.pop %v631
    %v651 = vmul.f32 1.0, %v650
    %v652 = vrcp.pop %v632
    %v653 = vmul.f32 1.0, %v652
    %v654 = vrcp.pop %v633
    %v655 = vmul.f32 1.0, %v654
    %v656 = vrcp.pop %v634
    %v657 = vmul.f32 1.0, %v656
    %v658 = vrcp.pop %v635
    %v659 = vmul.f32 1.0, %v658
    %v660 = vrcp.pop %v636
    %v661 = vmul.f32 1.0, %v660
    %v662 = vrcp.pop %v637
    %v663 = vmul.f32 1.0, %v662
    %v664 = vrcp.pop %v638
    %v665 = vmul.f32 1.0, %v664
    %v666 = vrcp.pop %v639
    %v667 = vmul.f32 1.0, %v666
    %v668 = vrcp.pop %v640
    %v669 = vmul.f32 1.0, %v668
    %v670 = vrcp.pop %v641
    %v671 = vmul.f32 1.0, %v670
    %v672 = vrcp.pop %v642
    %v673 = vmul.f32 1.0, %v672
    %v674 = vrcp.pop %v643
    %v675 = vmul.f32 1.0, %v674
    %v692 = vlaneseq
    %v693 = vand.u32 %v692, 127
    %v694 = vlaneseq
    %v695 = vshrl.u32 %v694, 7
    %v696 = vsub.s32 %v693, %v695
    %v697 = vrot.slane %v645, %v696
    %v698 = vadd.s32 %v693, 4294967288
    %v699 = vlaneseq
    %v700 = vshrl.u32 %v699, 7
    %v701 = vsub.s32 %v698, %v700
    %v702 = vrot.slane %v647, %v701
    %vm703 = vcmask 130112
    %v704 = vsel %vm703, %v702, %v697
    %v705 = vadd.s32 %v693, 4294967280
    %v706 = vlaneseq
    %v707 = vshrl.u32 %v706, 7
    %v708 = vsub.s32 %v705, %v707
    %v709 = vrot.slane %v649, %v708
    %vm710 = vcmask 195712
    %v711 = vsel %vm710, %v709, %v704
    %v712 = vadd.s32 %v693, 4294967272
    %v713 = vlaneseq
    %v714 = vshrl.u32 %v713, 7
    %v715 = vsub.s32 %v712, %v714
    %v716 = vrot.slane %v651, %v715
    %vm717 = vcmask 261312
    %v718 = vsel %vm717, %v716, %v711
    %v719 = vadd.s32 %v693, 4294967264
    %v720 = vlaneseq
    %v721 = vshrl.u32 %v720, 7
    %v722 = vsub.s32 %v719, %v721
    %v723 = vrot.slane %v653, %v722
    %vm724 = vcmask 326912
    %v725 = vsel %vm724, %v723, %v718
    %v726 = vadd.s32 %v693, 4294967256
    %v727 = vlaneseq
    %v728 = vshrl.u32 %v727, 7
    %v729 = vsub.s32 %v726, %v728
    %v730 = vrot.slane %v655, %v729
    %vm731 = vcmask 392512
    %v732 = vsel %vm731, %v730, %v725
    %v733 = vadd.s32 %v693, 4294967248
    %v734 = vlaneseq
    %v735 = vshrl.u32 %v734, 7
    %v736 = vsub.s32 %v733, %v735
    %v737 = vrot.slane %v657, %v736
    %vm738 = vcmask 458112
    %v739 = vsel %vm738, %v737, %v732
    %v740 = vadd.s32 %v693, 4294967240
    %v741 = vlaneseq
    %v742 = vshrl.u32 %v741, 7
    %v743 = vsub.s32 %v740, %v742
    %v744 = vrot.slane %v659, %v743
    %vm745 = vcmask 523712
    %v746 = vsel %vm745, %v744, %v739
    %v747 = vadd.s32 %v693, 4294967232
    %v748 = vlaneseq
    %v749 = vshrl.u32 %v748, 7
    %v750 = vsub.s32 %v747, %v749
    %v751 = vrot.slane %v661, %v750
    %vm752 = vcmask 589312
    %v753 = vsel %vm752, %v751, %v746
    %v754 = vadd.s32 %v693, 4294967224
    %v755 = vlaneseq
    %v756 = vshrl.u32 %v755, 7
    %v757 = vsub.s32 %v754, %v756
    %v758 = vrot.slane %v663, %v757
    %vm759 = vcmask 654912
    %v760 = vsel %vm759, %v758, %v753
    %v761 = vadd.s32 %v693, 4294967216
    %v762 = vlaneseq
    %v763 = vshrl.u32 %v762, 7
    %v764 = vsub.s32 %v761, %v763
    %v765 = vrot.slane %v665, %v764
    %vm766 = vcmask 720512
    %v767 = vsel %vm766, %v765, %v760
    %v768 = vadd.s32 %v693, 4294967208
    %v769 = vlaneseq
    %v770 = vshrl.u32 %v769, 7
    %v771 = vsub.s32 %v768, %v770
    %v772 = vrot.slane %v667, %v771
    %vm773 = vcmask 786112
    %v774 = vsel %vm773, %v772, %v767
    %v775 = vadd.s32 %v693, 4294967200
    %v776 = vlaneseq
    %v777 = vshrl.u32 %v776, 7
    %v778 = vsub.s32 %v775, %v777
    %v779 = vrot.slane %v669, %v778
    %vm780 = vcmask 851712
    %v781 = vsel %vm780, %v779, %v774
    %v782 = vadd.s32 %v693, 4294967192
    %v783 = vlaneseq
    %v784 = vshrl.u32 %v783, 7
    %v785 = vsub.s32 %v782, %v784
    %v786 = vrot.slane %v671, %v785
    %vm787 = vcmask 917312
    %v788 = vsel %vm787, %v786, %v781
    %v789 = vadd.s32 %v693, 4294967184
    %v790 = vlaneseq
    %v791 = vshrl.u32 %v790, 7
    %v792 = vsub.s32 %v789, %v791
    %v793 = vrot.slane %v673, %v792
    %vm794 = vcmask 982912
    %v795 = vsel %vm794, %v793, %v788
    %v796 = vadd.s32 %v693, 4294967176
    %v797 = vlaneseq
    %v798 = vshrl.u32 %v797, 7
    %v799 = vsub.s32 %v796, %v798
    %v800 = vrot.slane %v675, %v799
    %vm801 = vcmask 1048512
    %v802 = vsel %vm801, %v800, %v795
    %804 = vst [vmem:[#allocation3] sm:$0x1] %v802
    // Predicated region
    $region30: #{tpu_custom_call.1} parent=1 // pred_check
      _
    $region31: #{tpu_custom_call.1} parent=1 // pred_check_branch
      %806 = sbr.rel (0) target = $region33
    $region32: #{tpu_custom_call.1} parent=1 // pred_region
      %s808 = ssub.s32 16, 16
      %809 = vsyncadd [#allocation4], %s808
      %s811 = sshll.u32 [#allocation3], 4
      %s812 = int_to_ptr.vmem [resolvable:$true] %s811
      %814 = dma.vmem_to_hbm [thread:$0]  %s812, 16, %s7, [#allocation4]
    $region33: #{tpu_custom_call.1} parent=1 // pred_fallthru
      _
    // Predicated region
    $region34: #{tpu_custom_call.1} parent=1 // pred_check
      _
    $region35: #{tpu_custom_call.1} parent=1 // pred_check_branch
      %816 = sbr.rel (0) target = $region37
    $region36: #{tpu_custom_call.1} parent=1 // pred_region
      %817 = dma.done [#allocation4], 16
    $region37: #{tpu_custom_call.1} parent=1 // pred_fallthru
      _
    %818 = vsyncpa [#allocation4], 1

</llo_original>
